<compile_context>
chip_gen: v7x
topology: tpu7x:2x2x1
jax: 0.10.0
libtpu: 0.0.40
codegen_flags: <defaults>
</compile_context>

<pallas_src>
import jax
import jax.numpy as jnp
from jax.experimental import pallas as pl
from jax.experimental.pallas import tpu as pltpu


def neuralcd_kernel(stu_ref, kd_ref, ed_ref, kn_ref,
                    w1_ref, b1_ref, w2_ref, b2_ref, w3_ref, b3_ref,
                    out_ref):
    # ----- elementwise preamble (f32 on VPU/EUP) -----
    stu = jax.nn.sigmoid(stu_ref[...])                     # (TM, K)
    kd = jax.nn.sigmoid(kd_ref[...])                       # (TM, K)
    ed = jax.nn.sigmoid(ed_ref[...]) * 10.0                # (TM, 1)
    x = ed * (stu - kd) * kn_ref[...]                      # (TM, K), f32

    # ----- prednet_full1 / prednet_full2 (bf16 operands, f32 accumulation) -----
    h1 = jax.nn.sigmoid(
        jnp.dot(x.astype(jnp.bfloat16), w1_ref[...],
                preferred_element_type=jnp.float32) + b1_ref[...])   # (TM, L1)
    h2 = jax.nn.sigmoid(
        jnp.dot(h1.astype(jnp.bfloat16), w2_ref[...],
                preferred_element_type=jnp.float32) + b2_ref[...])   # (TM, L2)

    # ----- prednet_full3 (out_features=1): w3_row . h2^T -> lane-dense (1, TM) -----
    logit = jax.lax.dot_general(
        w3_ref[...], h2.astype(jnp.bfloat16),
        dimension_numbers=(((1,), (1,)), ((), ())),
        preferred_element_type=jnp.float32) + b3_ref[0]              # (1, TM)
    out_ref[...] = jax.nn.sigmoid(logit)[None]                       # (1, 1, TM)


def neuralcd_forward(stu_id, exer_id, kn_emb, params, *, tm=512):
    # Embedding row-gathers: pure indexing glue, kept in plain JAX.
    # TODO(synk): fuse the gathers into the kernel (scalar-prefetch ids + manual
    # DMA row gather) to save one HBM round-trip of the gathered activations.
    stu_e = params["student_emb"][stu_id]          # (B, K)
    kd_e = params["k_difficulty"][exer_id]         # (B, K)
    ed_e = params["e_discrimination"][exer_id]     # (B, 1)

    B, K = stu_e.shape
    l1 = params["w1"].shape[1]
    l2 = params["w2"].shape[1]

    n_tiles = pl.cdiv(B, tm)
    b_pad = n_tiles * tm
    pad = b_pad - B
    if pad:
        stu_e = jnp.pad(stu_e, ((0, pad), (0, 0)))
        kd_e = jnp.pad(kd_e, ((0, pad), (0, 0)))
        ed_e = jnp.pad(ed_e, ((0, pad), (0, 0)))
        kn_emb = jnp.pad(kn_emb, ((0, pad), (0, 0)))

    # bf16 matmul operands; biases stay f32.
    w1 = params["w1"].astype(jnp.bfloat16)
    w2 = params["w2"].astype(jnp.bfloat16)
    w3 = params["w3"].reshape(1, l2).astype(jnp.bfloat16)   # row form for w3 . h2^T
    b1 = params["b1"].reshape(1, l1).astype(jnp.float32)
    b2 = params["b2"].reshape(1, l2).astype(jnp.float32)
    b3 = params["b3"].reshape(1).astype(jnp.float32)

    def act_spec(cols):
        return pl.BlockSpec((tm, cols), lambda i: (i, 0))

    def resident_spec(shape):
        return pl.BlockSpec(shape, lambda i: (0, 0))

    out = pl.pallas_call(
        neuralcd_kernel,
        out_shape=jax.ShapeDtypeStruct((n_tiles, 1, tm), jnp.float32),
        grid=(n_tiles,),
        in_specs=[
            act_spec(K),                 # gathered student_emb rows
            act_spec(K),                 # gathered k_difficulty rows
            act_spec(1),                 # gathered e_discrimination rows
            act_spec(K),                 # kn_emb
            resident_spec((K, l1)),      # w1 (bf16), VMEM-resident across tiles
            resident_spec((1, l1)),      # b1
            resident_spec((l1, l2)),     # w2
            resident_spec((1, l2)),      # b2
            resident_spec((1, l2)),      # w3 row
            pl.BlockSpec(memory_space=pltpu.MemorySpace.SMEM),   # b3 scalar
        ],
        out_specs=pl.BlockSpec((1, 1, tm), lambda i: (i, 0, 0)),
        compiler_params=pltpu.CompilerParams(
            dimension_semantics=("parallel",)),
    )(stu_e, kd_e, ed_e, kn_emb, w1, b1, w2, b2, w3, b3)

    return out.reshape(b_pad, 1)[:B]


def neuralcd_reference(stu_id, exer_id, kn_emb, params):
    stu = jax.nn.sigmoid(params["student_emb"][stu_id])
    kd = jax.nn.sigmoid(params["k_difficulty"][exer_id])
    ed = jax.nn.sigmoid(params["e_discrimination"][exer_id]) * 10.0
    x = ed * (stu - kd) * kn_emb
    h1 = jax.nn.sigmoid(x @ params["w1"] + params["b1"])
    h2 = jax.nn.sigmoid(h1 @ params["w2"] + params["b2"])
    return jax.nn.sigmoid(h2 @ params["w3"] + params["b3"])


def xavier_normal(key, shape):
    fan_in, fan_out = shape
    std = (2.0 / (fan_in + fan_out)) ** 0.5
    return std * jax.random.normal(key, shape, dtype=jnp.float32)


def init_params(key, student_n, exer_n, knowledge_n, l1=512, l2=256):
    keys = jax.random.split(key, 9)
    # Embeddings and Linear weights are xavier_normal'd as in the module.
    # Linear weights are stored transposed (in, out) for the kernel.
    return {
        "student_emb": xavier_normal(keys[0], (student_n, knowledge_n)),
        "k_difficulty": xavier_normal(keys[1], (exer_n, knowledge_n)),
        "e_discrimination": xavier_normal(keys[2], (exer_n, 1)),
        "w1": xavier_normal(keys[3], (knowledge_n, l1)),
        "b1": 0.01 * jax.random.normal(keys[4], (1, l1), dtype=jnp.float32),
        "w2": xavier_normal(keys[5], (l1, l2)),
        "b2": 0.01 * jax.random.normal(keys[6], (1, l2), dtype=jnp.float32),
        "w3": xavier_normal(keys[7], (l2, 1)),
        "b3": 0.01 * jax.random.normal(keys[8], (1, 1), dtype=jnp.float32),
    }


if __name__ == "__main__":
    student_n, exer_n, knowledge_n = 16, 20, 32
    batch = 200          # not a multiple of the tile -> exercises tail padding
    tm = 128             # 2 grid tiles (b_pad = 256)

    key = jax.random.PRNGKey(0)
    kp, k_stu, k_exer, k_kn = jax.random.split(key, 4)

    params = init_params(kp, student_n, exer_n, knowledge_n)

    stu_id = jax.random.randint(k_stu, (batch,), 0, student_n, dtype=jnp.int32)
    exer_id = jax.random.randint(k_exer, (batch,), 0, exer_n, dtype=jnp.int32)
    kn_emb = jax.random.bernoulli(k_kn, 0.3, (batch, knowledge_n)).astype(jnp.float32)

    out = neuralcd_forward(stu_id, exer_id, kn_emb, params, tm=tm)
    out = jax.block_until_ready(out)

    ref = neuralcd_reference(stu_id, exer_id, kn_emb, params)
    assert out.shape == (batch, 1)
    assert bool(jnp.all(jnp.isfinite(out)))
    max_err = float(jnp.max(jnp.abs(out - ref)))
    assert max_err < 5e-2, f"mismatch vs reference: {max_err}"
    print("KERNEL_OK")
</pallas_src>

<mosaic_0001>
module attributes {stable_mosaic.version = 11 : i64} {
  func.func @neuralcd_kernel(%arg0: i32, %arg1: memref<128x32xf32, #tpu.memory_space<vmem>>, %arg2: memref<128x32xf32, #tpu.memory_space<vmem>>, %arg3: memref<128x1xf32, #tpu.memory_space<vmem>>, %arg4: memref<128x32xf32, #tpu.memory_space<vmem>>, %arg5: memref<32x512xbf16, #tpu.memory_space<vmem>>, %arg6: memref<1x512xf32, #tpu.memory_space<vmem>>, %arg7: memref<512x256xbf16, #tpu.memory_space<vmem>>, %arg8: memref<1x256xf32, #tpu.memory_space<vmem>>, %arg9: memref<1x256xbf16, #tpu.memory_space<vmem>>, %arg10: memref<1xf32, #tpu.memory_space<smem>>, %arg11: memref<1x1x128xf32, #tpu.memory_space<vmem>>) attributes {dimension_semantics = [#tpu.dimension_semantics<parallel>], iteration_bounds = array<i64: 2>, scalar_prefetch = 0 : i64, scratch_operands = 0 : i64, tpu.core_type = #tpu.core_type<tc>, window_params = [{transform_indices = @transform_0, window_bounds = array<i64: 128, 32>}, {transform_indices = @transform_1, window_bounds = array<i64: 128, 32>}, {transform_indices = @transform_2, window_bounds = array<i64: 128, 1>}, {transform_indices = @transform_3, window_bounds = array<i64: 128, 32>}, {pipeline_mode = #tpu.pipeline_mode<synchronous>, transform_indices = @transform_4, window_bounds = array<i64: 32, 512>}, {pipeline_mode = #tpu.pipeline_mode<synchronous>, transform_indices = @transform_5, window_bounds = array<i64: 1, 512>}, {pipeline_mode = #tpu.pipeline_mode<synchronous>, transform_indices = @transform_6, window_bounds = array<i64: 512, 256>}, {pipeline_mode = #tpu.pipeline_mode<synchronous>, transform_indices = @transform_7, window_bounds = array<i64: 1, 256>}, {pipeline_mode = #tpu.pipeline_mode<synchronous>, transform_indices = @transform_8, window_bounds = array<i64: 1, 256>}, {transform_indices = @transform_9, window_bounds = array<i64: 1>}, {transform_indices = @transform_10, window_bounds = array<i64: 1, 1, 128>}]} {
    %c0 = arith.constant 0 : index
    %c0_0 = arith.constant 0 : index
    %0 = vector.load %arg1[%c0, %c0_0] : memref<128x32xf32, #tpu.memory_space<vmem>>, vector<128x32xf32>
    %1 = arith.negf %0 : vector<128x32xf32>
    %2 = math.exp %1 : vector<128x32xf32>
    %cst = arith.constant 1.000000e+00 : f32
    %3 = vector.broadcast %cst : f32 to vector<128x32xf32>
    %4 = arith.addf %3, %2 : vector<128x32xf32>
    %5 = arith.divf %3, %4 : vector<128x32xf32>
    %c0_1 = arith.constant 0 : index
    %c0_2 = arith.constant 0 : index
    %6 = vector.load %arg2[%c0_1, %c0_2] : memref<128x32xf32, #tpu.memory_space<vmem>>, vector<128x32xf32>
    %7 = arith.negf %6 : vector<128x32xf32>
    %8 = math.exp %7 : vector<128x32xf32>
    %cst_3 = arith.constant 1.000000e+00 : f32
    %9 = vector.broadcast %cst_3 : f32 to vector<128x32xf32>
    %10 = arith.addf %9, %8 : vector<128x32xf32>
    %11 = arith.divf %9, %10 : vector<128x32xf32>
    %c0_4 = arith.constant 0 : index
    %c0_5 = arith.constant 0 : index
    %12 = vector.load %arg3[%c0_4, %c0_5] : memref<128x1xf32, #tpu.memory_space<vmem>>, vector<128x1xf32>
    %13 = arith.negf %12 : vector<128x1xf32>
    %14 = math.exp %13 : vector<128x1xf32>
    %cst_6 = arith.constant 1.000000e+00 : f32
    %15 = vector.broadcast %cst_6 : f32 to vector<128x1xf32>
    %16 = arith.addf %15, %14 : vector<128x1xf32>
    %17 = arith.divf %15, %16 : vector<128x1xf32>
    %cst_7 = arith.constant 1.000000e+01 : f32
    %18 = vector.broadcast %cst_7 : f32 to vector<128x1xf32>
    %19 = arith.mulf %17, %18 : vector<128x1xf32>
    %20 = arith.subf %5, %11 : vector<128x32xf32>
    %21 = vector.broadcast %19 : vector<128x1xf32> to vector<128x32xf32>
    %22 = arith.mulf %21, %20 : vector<128x32xf32>
    %c0_8 = arith.constant 0 : index
    %c0_9 = arith.constant 0 : index
    %23 = vector.load %arg4[%c0_8, %c0_9] : memref<128x32xf32, #tpu.memory_space<vmem>>, vector<128x32xf32>
    %24 = arith.mulf %22, %23 : vector<128x32xf32>
    %25 = arith.truncf %24 : vector<128x32xf32> to vector<128x32xbf16>
    %c0_10 = arith.constant 0 : index
    %c0_11 = arith.constant 0 : index
    %26 = vector.load %arg5[%c0_10, %c0_11] : memref<32x512xbf16, #tpu.memory_space<vmem>>, vector<32x512xbf16>
    %cst_12 = arith.constant dense<0.000000e+00> : vector<128x512xf32>
    %27 = tpu.matmul %25, %26, %cst_12 {dimension_numbers = #tpu.dot_dimension_numbers<[1], [0], [0], [1], [0, 0, 1, 1], [], []>} : vector<128x32xbf16>, vector<32x512xbf16>, vector<128x512xf32> -> vector<128x512xf32>
    %c0_13 = arith.constant 0 : index
    %c0_14 = arith.constant 0 : index
    %28 = vector.load %arg6[%c0_13, %c0_14] : memref<1x512xf32, #tpu.memory_space<vmem>>, vector<1x512xf32>
    %29 = vector.broadcast %28 : vector<1x512xf32> to vector<128x512xf32>
    %30 = arith.addf %27, %29 : vector<128x512xf32>
    %31 = arith.negf %30 : vector<128x512xf32>
    %32 = math.exp %31 : vector<128x512xf32>
    %cst_15 = arith.constant 1.000000e+00 : f32
    %33 = vector.broadcast %cst_15 : f32 to vector<128x512xf32>
    %34 = arith.addf %33, %32 : vector<128x512xf32>
    %35 = arith.divf %33, %34 : vector<128x512xf32>
    %36 = arith.truncf %35 : vector<128x512xf32> to vector<128x512xbf16>
    %c0_16 = arith.constant 0 : index
    %c0_17 = arith.constant 0 : index
    %37 = vector.load %arg7[%c0_16, %c0_17] : memref<512x256xbf16, #tpu.memory_space<vmem>>, vector<512x256xbf16>
    %cst_18 = arith.constant dense<0.000000e+00> : vector<128x256xf32>
    %38 = tpu.matmul %36, %37, %cst_18 {dimension_numbers = #tpu.dot_dimension_numbers<[1], [0], [0], [1], [0, 0, 1, 1], [], []>} : vector<128x512xbf16>, vector<512x256xbf16>, vector<128x256xf32> -> vector<128x256xf32>
    %c0_19 = arith.constant 0 : index
    %c0_20 = arith.constant 0 : index
    %39 = vector.load %arg8[%c0_19, %c0_20] : memref<1x256xf32, #tpu.memory_space<vmem>>, vector<1x256xf32>
    %40 = vector.broadcast %39 : vector<1x256xf32> to vector<128x256xf32>
    %41 = arith.addf %38, %40 : vector<128x256xf32>
    %42 = arith.negf %41 : vector<128x256xf32>
    %43 = math.exp %42 : vector<128x256xf32>
    %cst_21 = arith.constant 1.000000e+00 : f32
    %44 = vector.broadcast %cst_21 : f32 to vector<128x256xf32>
    %45 = arith.addf %44, %43 : vector<128x256xf32>
    %46 = arith.divf %44, %45 : vector<128x256xf32>
    %c0_22 = arith.constant 0 : index
    %c0_23 = arith.constant 0 : index
    %47 = vector.load %arg9[%c0_22, %c0_23] : memref<1x256xbf16, #tpu.memory_space<vmem>>, vector<1x256xbf16>
    %48 = arith.truncf %46 : vector<128x256xf32> to vector<128x256xbf16>
    %cst_24 = arith.constant dense<0.000000e+00> : vector<1x128xf32>
    %49 = tpu.matmul %47, %48, %cst_24 {dimension_numbers = #tpu.dot_dimension_numbers<[1], [1], [0], [0], [0, 0, 1, 0], [], []>} : vector<1x256xbf16>, vector<128x256xbf16>, vector<1x128xf32> -> vector<1x128xf32>
    %c0_25 = arith.constant 0 : index
    %50 = memref.load %arg10[%c0_25] : memref<1xf32, #tpu.memory_space<smem>>
    %51 = vector.broadcast %50 : f32 to vector<1x128xf32>
    %52 = arith.addf %49, %51 : vector<1x128xf32>
    %53 = arith.negf %52 : vector<1x128xf32>
    %54 = math.exp %53 : vector<1x128xf32>
    %cst_26 = arith.constant 1.000000e+00 : f32
    %55 = vector.broadcast %cst_26 : f32 to vector<1x128xf32>
    %56 = arith.addf %55, %54 : vector<1x128xf32>
    %57 = arith.divf %55, %56 : vector<1x128xf32>
    %58 = vector.shape_cast %57 : vector<1x128xf32> to vector<1x1x128xf32>
    %c0_27 = arith.constant 0 : index
    %c0_28 = arith.constant 0 : index
    %c0_29 = arith.constant 0 : index
    %59 = vector.load %arg11[%c0_27, %c0_28, %c0_29] : memref<1x1x128xf32, #tpu.memory_space<vmem>>, vector<1x1x128xf32>
    tpu.vector_store %arg11[%c0_27, %c0_28, %c0_29], %58 {strides = array<i32>} : memref<1x1x128xf32, #tpu.memory_space<vmem>>, vector<1x1x128xf32>,
    return
  }
  func.func @transform_0(%arg0: i32) -> (i32, i32) {
    %c0_i32 = arith.constant 0 : i32
    %c0_i32_0 = arith.constant 0 : i32
    return %arg0, %c0_i32 : i32, i32
  }
  func.func @transform_1(%arg0: i32) -> (i32, i32) {
    %c0_i32 = arith.constant 0 : i32
    %c0_i32_0 = arith.constant 0 : i32
    return %arg0, %c0_i32 : i32, i32
  }
  func.func @transform_2(%arg0: i32) -> (i32, i32) {
    %c0_i32 = arith.constant 0 : i32
    %c0_i32_0 = arith.constant 0 : i32
    return %arg0, %c0_i32 : i32, i32
  }
  func.func @transform_3(%arg0: i32) -> (i32, i32) {
    %c0_i32 = arith.constant 0 : i32
    %c0_i32_0 = arith.constant 0 : i32
    return %arg0, %c0_i32 : i32, i32
  }
  func.func @transform_4(%arg0: i32) -> (i32, i32) {
    %c0_i32 = arith.constant 0 : i32
    %c0_i32_0 = arith.constant 0 : i32
    %c0_i32_1 = arith.constant 0 : i32
    return %c0_i32, %c0_i32_0 : i32, i32
  }
  func.func @transform_5(%arg0: i32) -> (i32, i32) {
    %c0_i32 = arith.constant 0 : i32
    %c0_i32_0 = arith.constant 0 : i32
    %c0_i32_1 = arith.constant 0 : i32
    return %c0_i32, %c0_i32_0 : i32, i32
  }
  func.func @transform_6(%arg0: i32) -> (i32, i32) {
    %c0_i32 = arith.constant 0 : i32
    %c0_i32_0 = arith.constant 0 : i32
    %c0_i32_1 = arith.constant 0 : i32
    return %c0_i32, %c0_i32_0 : i32, i32
  }
  func.func @transform_7(%arg0: i32) -> (i32, i32) {
    %c0_i32 = arith.constant 0 : i32
    %c0_i32_0 = arith.constant 0 : i32
    %c0_i32_1 = arith.constant 0 : i32
    return %c0_i32, %c0_i32_0 : i32, i32
  }
  func.func @transform_8(%arg0: i32) -> (i32, i32) {
    %c0_i32 = arith.constant 0 : i32
    %c0_i32_0 = arith.constant 0 : i32
    %c0_i32_1 = arith.constant 0 : i32
    return %c0_i32, %c0_i32_0 : i32, i32
  }
  func.func @transform_9(%arg0: i32) -> i32 {
    %c0_i32 = arith.constant 0 : i32
    %c0_i32_0 = arith.constant 0 : i32
    return %c0_i32 : i32
  }
  func.func @transform_10(%arg0: i32) -> (i32, i32, i32) {
    %c0_i32 = arith.constant 0 : i32
    %c0_i32_0 = arith.constant 0 : i32
    %c0_i32_1 = arith.constant 0 : i32
    return %arg0, %c0_i32, %c0_i32_0 : i32, i32, i32
  }
}

</mosaic_0001>

<llo_original>
// kernel: tpu_custom_call.1
$region0: #{tpu_custom_call.1}
  #allocation0 [shape = 'u32[]', space=smem, size = 0x4, offset = 0x4, fixed_abs, tag = 'smem constant byte address 0x4 - core index']
  #allocation1 [shape = 'u32[144,128]{1,0:T(1,128)}', space=vmem, size = 0x12000, scoped, tag = 'internal scratch']
  #allocation2 [shape = 'f32[1]{0:T(128)S(6)}', space=smem, size = 0x200, scoped, tag = 'scoped memory for tpu_custom_call.1']
  %s0 = inlined_call_operand.vmem [shape: f32[256,32], index: 0, kind: input, shape index: {}]
  %s1 = inlined_call_operand.vmem [shape: f32[256,32], index: 1, kind: input, shape index: {}]
  %s2 = inlined_call_operand.vmem [shape: f32[256,1], index: 2, kind: input, shape index: {}]
  %s3 = inlined_call_operand.vmem [shape: f32[256,32], index: 3, kind: input, shape index: {}]
  %s4 = inlined_call_operand.vmem [shape: bf16[32,512], index: 4, kind: input, shape index: {}]
  %s5 = inlined_call_operand.vmem [shape: f32[1,512], index: 5, kind: input, shape index: {}]
  %s6 = inlined_call_operand.vmem [shape: bf16[512,256], index: 6, kind: input, shape index: {}]
  %s7 = inlined_call_operand.vmem [shape: f32[1,256], index: 7, kind: input, shape index: {}]
  %s8 = inlined_call_operand.vmem [shape: bf16[1,256], index: 8, kind: input, shape index: {}]
  %s9 = inlined_call_operand.<no memory space> [shape: f32[1], index: 9, kind: input, shape index: {}]
  %s10 = inlined_call_operand.hbm [shape: f32[2,1,128], index: 10, kind: output, shape index: {}]
  %s11 = sld [smem:[#allocation0]]
  $region73: #{tpu_custom_call.1} parent=0
    _
  %s13 = ssub.s32 1, %s11
  %s14 = scalar_select 0, %s13, %s11
  %15 = sst [smem:[#allocation2]] %s9
  $region1: #{tpu_custom_call.1} parent=0
    #allocation3 [shape = 'u8[1024]{0}', space=vmem, size = 0x400, scoped, tag = 'output window, operand 0']
    #allocation4 [shape = 's32[2]{0}', space=sflag, size = 0x8, scoped, tag = 'scoped memory for tpu_custom_call.1']
    %16 = vsyncpa [#allocation4], 0
    %s17 = scalar_lea.sflag [#allocation4], 1
    %18 = vsyncpa %s17, 0
    loop: start=0, step=1, limit=4
    $region2: #{tpu_custom_call.1} parent=1 // loop_pre_header
      _
    $region3: #{tpu_custom_call.1} parent=1 // loop_header
      %s20 = sphi 0, %s24
      %p21 = scmp.ge.s32.totalorder %s20, 4
      %s30 = sphi 0, %s32
      %s33 = sphi 0, %s30
      %s34 = sphi 0, %s33
      %s50 = sphi 0, %s34
      %s56 = sphi 0, %s58
      %s59 = sphi 0, %s56
      %s60 = sphi 0, %s59
      %s76 = sphi 0, %s60
      %s82 = sphi 0, %s84
      %s85 = sphi 0, %s82
      %s86 = sphi 0, %s85
      %s102 = sphi 0, %s86
      %s108 = sphi 0, %s110
      %s111 = sphi 0, %s108
      %s112 = sphi 0, %s111
      %s128 = sphi 0, %s112
      %s132 = sphi 0, %s132
      %s134 = sphi 0, %s132
      %s135 = sphi 0, %s134
      %s149 = sphi 0, %s135
      %s153 = sphi 0, %s153
      %s155 = sphi 0, %s153
      %s156 = sphi 0, %s155
      %s170 = sphi 0, %s156
      %s174 = sphi 0, %s174
      %s176 = sphi 0, %s174
      %s177 = sphi 0, %s176
      %s191 = sphi 0, %s177
      %s195 = sphi 0, %s195
      %s197 = sphi 0, %s195
      %s198 = sphi 0, %s197
      %s212 = sphi 0, %s198
      %s216 = sphi 0, %s216
      %s218 = sphi 0, %s216
      %s219 = sphi 0, %s218
      %s233 = sphi 0, %s219
      %s237 = sphi 0, %s237
      %s239 = sphi 0, %s237
      %s240 = sphi 0, %s239
      %s254 = sphi 0, %s240
      %s260 = sphi 0, %s262
      %s263 = sphi 0, %s260
      %s264 = sphi 0, %s263
      %s280 = sphi 0, %s264
    $region4: #{tpu_custom_call.1} parent=1 // loop_header_branch
      %23 = sbr.rel (%p21) target = $region8
    $region5: #{tpu_custom_call.1} parent=1 // loop_body
      %s25 = ssub.s32 %s20, 1
      %s26 = ssub.s32 %s20, 2
      %s27 = sadd.s32 %s20, 1
      %s28 = ssub.s32 %s20, %s27
      %p29 = scmp.eq.s32.totalorder %s28, 0
      %s31 = sadd.s32 %s30, 1
      %s32 = scalar_select %p29, %s30, %s31
      %p35 = pneg %p29
      %p36 = scmp.eq.s32.totalorder %s20, 1
      %p37 = por %p35, %p36
      %p38 = scmp.ne.s32.totalorder %s30, %s33
      %p39 = scmp.eq.s32.totalorder %s20, 0
      %p40 = por %p38, %p39
      %p41 = scmp.ne.s32.totalorder %s30, %s33
      %p42 = scmp.eq.s32.totalorder %s25, 1
      %p43 = por %p41, %p42
      %p44 = scmp.ne.s32.totalorder %s33, %s34
      %p45 = scmp.eq.s32.totalorder %s25, 0
      %p46 = por %p44, %p45
      %p47 = scmp.ne.s32.totalorder %s33, %s34
      %p48 = scmp.eq.s32.totalorder %s26, 1
      %p49 = por %p47, %p48
      %p51 = scmp.ne.s32.totalorder %s34, %s50
      %p52 = scmp.eq.s32.totalorder %s26, 0
      %p53 = por %p51, %p52
      %s54 = ssub.s32 %s20, %s27
      %p55 = scmp.eq.s32.totalorder %s54, 0
      %s57 = sadd.s32 %s56, 1
      %s58 = scalar_select %p55, %s56, %s57
      %p61 = pneg %p55
      %p62 = scmp.eq.s32.totalorder %s20, 1
      %p63 = por %p61, %p62
      %p64 = scmp.ne.s32.totalorder %s56, %s59
      %p65 = scmp.eq.s32.totalorder %s20, 0
      %p66 = por %p64, %p65
      %p67 = scmp.ne.s32.totalorder %s56, %s59
      %p68 = scmp.eq.s32.totalorder %s25, 1
      %p69 = por %p67, %p68
      %p70 = scmp.ne.s32.totalorder %s59, %s60
      %p71 = scmp.eq.s32.totalorder %s25, 0
      %p72 = por %p70, %p71
      %p73 = scmp.ne.s32.totalorder %s59, %s60
      %p74 = scmp.eq.s32.totalorder %s26, 1
      %p75 = por %p73, %p74
      %p77 = scmp.ne.s32.totalorder %s60, %s76
      %p78 = scmp.eq.s32.totalorder %s26, 0
      %p79 = por %p77, %p78
      %s80 = ssub.s32 %s20, %s27
      %p81 = scmp.eq.s32.totalorder %s80, 0
      %s83 = sadd.s32 %s82, 1
      %s84 = scalar_select %p81, %s82, %s83
      %p87 = pneg %p81
      %p88 = scmp.eq.s32.totalorder %s20, 1
      %p89 = por %p87, %p88
      %p90 = scmp.ne.s32.totalorder %s82, %s85
      %p91 = scmp.eq.s32.totalorder %s20, 0
      %p92 = por %p90, %p91
      %p93 = scmp.ne.s32.totalorder %s82, %s85
      %p94 = scmp.eq.s32.totalorder %s25, 1
      %p95 = por %p93, %p94
      %p96 = scmp.ne.s32.totalorder %s85, %s86
      %p97 = scmp.eq.s32.totalorder %s25, 0
      %p98 = por %p96, %p97
      %p99 = scmp.ne.s32.totalorder %s85, %s86
      %p100 = scmp.eq.s32.totalorder %s26, 1
      %p101 = por %p99, %p100
      %p103 = scmp.ne.s32.totalorder %s86, %s102
      %p104 = scmp.eq.s32.totalorder %s26, 0
      %p105 = por %p103, %p104
      %s106 = ssub.s32 %s20, %s27
      %p107 = scmp.eq.s32.totalorder %s106, 0
      %s109 = sadd.s32 %s108, 1
      %s110 = scalar_select %p107, %s108, %s109
      %p113 = pneg %p107
      %p114 = scmp.eq.s32.totalorder %s20, 1
      %p115 = por %p113, %p114
      %p116 = scmp.ne.s32.totalorder %s108, %s111
      %p117 = scmp.eq.s32.totalorder %s20, 0
      %p118 = por %p116, %p117
      %p119 = scmp.ne.s32.totalorder %s108, %s111
      %p120 = scmp.eq.s32.totalorder %s25, 1
      %p121 = por %p119, %p120
      %p122 = scmp.ne.s32.totalorder %s111, %s112
      %p123 = scmp.eq.s32.totalorder %s25, 0
      %p124 = por %p122, %p123
      %p125 = scmp.ne.s32.totalorder %s111, %s112
      %p126 = scmp.eq.s32.totalorder %s26, 1
      %p127 = por %p125, %p126
      %p129 = scmp.ne.s32.totalorder %s112, %s128
      %p130 = scmp.eq.s32.totalorder %s26, 0
      %p131 = por %p129, %p130
      %s133 = sadd.s32 %s132, 1
      %p136 = scmp.eq.s32.totalorder %s20, 1
      %p137 = scmp.ne.s32.totalorder %s132, %s134
      %p138 = scmp.eq.s32.totalorder %s20, 0
      %p139 = por %p137, %p138
      %p140 = scmp.ne.s32.totalorder %s132, %s134
      %p141 = scmp.eq.s32.totalorder %s25, 1
      %p142 = por %p140, %p141
      %p143 = scmp.ne.s32.totalorder %s134, %s135
      %p144 = scmp.eq.s32.totalorder %s25, 0
      %p145 = por %p143, %p144
      %p146 = scmp.ne.s32.totalorder %s134, %s135
      %p147 = scmp.eq.s32.totalorder %s26, 1
      %p148 = por %p146, %p147
      %p150 = scmp.ne.s32.totalorder %s135, %s149
      %p151 = scmp.eq.s32.totalorder %s26, 0
      %p152 = por %p150, %p151
      %s154 = sadd.s32 %s153, 1
      %p157 = scmp.eq.s32.totalorder %s20, 1
      %p158 = scmp.ne.s32.totalorder %s153, %s155
      %p159 = scmp.eq.s32.totalorder %s20, 0
      %p160 = por %p158, %p159
      %p161 = scmp.ne.s32.totalorder %s153, %s155
      %p162 = scmp.eq.s32.totalorder %s25, 1
      %p163 = por %p161, %p162
      %p164 = scmp.ne.s32.totalorder %s155, %s156
      %p165 = scmp.eq.s32.totalorder %s25, 0
      %p166 = por %p164, %p165
      %p167 = scmp.ne.s32.totalorder %s155, %s156
      %p168 = scmp.eq.s32.totalorder %s26, 1
      %p169 = por %p167, %p168
      %p171 = scmp.ne.s32.totalorder %s156, %s170
      %p172 = scmp.eq.s32.totalorder %s26, 0
      %p173 = por %p171, %p172
      %s175 = sadd.s32 %s174, 1
      %p178 = scmp.eq.s32.totalorder %s20, 1
      %p179 = scmp.ne.s32.totalorder %s174, %s176
      %p180 = scmp.eq.s32.totalorder %s20, 0
      %p181 = por %p179, %p180
      %p182 = scmp.ne.s32.totalorder %s174, %s176
      %p183 = scmp.eq.s32.totalorder %s25, 1
      %p184 = por %p182, %p183
      %p185 = scmp.ne.s32.totalorder %s176, %s177
      %p186 = scmp.eq.s32.totalorder %s25, 0
      %p187 = por %p185, %p186
      %p188 = scmp.ne.s32.totalorder %s176, %s177
      %p189 = scmp.eq.s32.totalorder %s26, 1
      %p190 = por %p188, %p189
      %p192 = scmp.ne.s32.totalorder %s177, %s191
      %p193 = scmp.eq.s32.totalorder %s26, 0
      %p194 = por %p192, %p193
      %s196 = sadd.s32 %s195, 1
      %p199 = scmp.eq.s32.totalorder %s20, 1
      %p200 = scmp.ne.s32.totalorder %s195, %s197
      %p201 = scmp.eq.s32.totalorder %s20, 0
      %p202 = por %p200, %p201
      %p203 = scmp.ne.s32.totalorder %s195, %s197
      %p204 = scmp.eq.s32.totalorder %s25, 1
      %p205 = por %p203, %p204
      %p206 = scmp.ne.s32.totalorder %s197, %s198
      %p207 = scmp.eq.s32.totalorder %s25, 0
      %p208 = por %p206, %p207
      %p209 = scmp.ne.s32.totalorder %s197, %s198
      %p210 = scmp.eq.s32.totalorder %s26, 1
      %p211 = por %p209, %p210
      %p213 = scmp.ne.s32.totalorder %s198, %s212
      %p214 = scmp.eq.s32.totalorder %s26, 0
      %p215 = por %p213, %p214
      %s217 = sadd.s32 %s216, 1
      %p220 = scmp.eq.s32.totalorder %s20, 1
      %p221 = scmp.ne.s32.totalorder %s216, %s218
      %p222 = scmp.eq.s32.totalorder %s20, 0
      %p223 = por %p221, %p222
      %p224 = scmp.ne.s32.totalorder %s216, %s218
      %p225 = scmp.eq.s32.totalorder %s25, 1
      %p226 = por %p224, %p225
      %p227 = scmp.ne.s32.totalorder %s218, %s219
      %p228 = scmp.eq.s32.totalorder %s25, 0
      %p229 = por %p227, %p228
      %p230 = scmp.ne.s32.totalorder %s218, %s219
      %p231 = scmp.eq.s32.totalorder %s26, 1
      %p232 = por %p230, %p231
      %p234 = scmp.ne.s32.totalorder %s219, %s233
      %p235 = scmp.eq.s32.totalorder %s26, 0
      %p236 = por %p234, %p235
      %s238 = sadd.s32 %s237, 1
      %p241 = scmp.eq.s32.totalorder %s20, 1
      %p242 = scmp.ne.s32.totalorder %s237, %s239
      %p243 = scmp.eq.s32.totalorder %s20, 0
      %p244 = por %p242, %p243
      %p245 = scmp.ne.s32.totalorder %s237, %s239
      %p246 = scmp.eq.s32.totalorder %s25, 1
      %p247 = por %p245, %p246
      %p248 = scmp.ne.s32.totalorder %s239, %s240
      %p249 = scmp.eq.s32.totalorder %s25, 0
      %p250 = por %p248, %p249
      %p251 = scmp.ne.s32.totalorder %s239, %s240
      %p252 = scmp.eq.s32.totalorder %s26, 1
      %p253 = por %p251, %p252
      %p255 = scmp.ne.s32.totalorder %s240, %s254
      %p256 = scmp.eq.s32.totalorder %s26, 0
      %p257 = por %p255, %p256
      %s258 = ssub.s32 %s20, %s27
      %p259 = scmp.eq.s32.totalorder %s258, 0
      %s261 = sadd.s32 %s260, 1
      %s262 = scalar_select %p259, %s260, %s261
      %p265 = pneg %p259
      %p266 = scmp.eq.s32.totalorder %s20, 1
      %p267 = por %p265, %p266
      %p268 = scmp.ne.s32.totalorder %s260, %s263
      %p269 = scmp.eq.s32.totalorder %s20, 0
      %p270 = por %p268, %p269
      %p271 = scmp.ne.s32.totalorder %s260, %s263
      %p272 = scmp.eq.s32.totalorder %s25, 1
      %p273 = por %p271, %p272
      %p274 = scmp.ne.s32.totalorder %s263, %s264
      %p275 = scmp.eq.s32.totalorder %s25, 0
      %p276 = por %p274, %p275
      %p277 = scmp.ne.s32.totalorder %s263, %s264
      %p278 = scmp.eq.s32.totalorder %s26, 1
      %p279 = por %p277, %p278
      %p281 = scmp.ne.s32.totalorder %s264, %s280
      %p282 = scmp.eq.s32.totalorder %s26, 0
      %p283 = por %p281, %p282
      %p284 = scmp.le.s32.totalorder 1, %s20
      %p285 = scmp.lt.s32.totalorder %s20, 3
      %p286 = pnand %p284, %p285
      %p287 = pneg %p286
      // Predicated region
      $region9: #{tpu_custom_call.1} parent=5 // pred_check
        _
      $region10: #{tpu_custom_call.1} parent=5 // pred_check_branch
        %289 = sbr.rel (%p286) target = $region12
      $region11: #{tpu_custom_call.1} parent=5 // pred_region
        %s290 = ssub.s32 %s20, 1
        // Predicated region
        $region13: #{tpu_custom_call.1} parent=11 // pred_check
          %p291 = pneg %p145
        $region14: #{tpu_custom_call.1} parent=11 // pred_check_branch
          %293 = sbr.rel (%p291) target = $region16
        $region15: #{tpu_custom_call.1} parent=11 // pred_region
          _
        $region16: #{tpu_custom_call.1} parent=11 // pred_fallthru
          _
        // Predicated region
        $region17: #{tpu_custom_call.1} parent=11 // pred_check
          %p294 = pneg %p166
        $region18: #{tpu_custom_call.1} parent=11 // pred_check_branch
          %296 = sbr.rel (%p294) target = $region20
        $region19: #{tpu_custom_call.1} parent=11 // pred_region
          _
        $region20: #{tpu_custom_call.1} parent=11 // pred_fallthru
          _
        // Predicated region
        $region21: #{tpu_custom_call.1} parent=11 // pred_check
          %p297 = pneg %p187
        $region22: #{tpu_custom_call.1} parent=11 // pred_check_branch
          %299 = sbr.rel (%p297) target = $region24
        $region23: #{tpu_custom_call.1} parent=11 // pred_region
          _
        $region24: #{tpu_custom_call.1} parent=11 // pred_fallthru
          _
        // Predicated region
        $region25: #{tpu_custom_call.1} parent=11 // pred_check
          %p300 = pneg %p208
        $region26: #{tpu_custom_call.1} parent=11 // pred_check_branch
          %302 = sbr.rel (%p300) target = $region28
        $region27: #{tpu_custom_call.1} parent=11 // pred_region
          _
        $region28: #{tpu_custom_call.1} parent=11 // pred_fallthru
          _
        // Predicated region
        $region29: #{tpu_custom_call.1} parent=11 // pred_check
          %p303 = pneg %p229
        $region30: #{tpu_custom_call.1} parent=11 // pred_check_branch
          %305 = sbr.rel (%p303) target = $region32
        $region31: #{tpu_custom_call.1} parent=11 // pred_region
          _
        $region32: #{tpu_custom_call.1} parent=11 // pred_fallthru
          _
        // Predicated region
        $region33: #{tpu_custom_call.1} parent=11 // pred_check
          %p306 = pneg %p250
        $region34: #{tpu_custom_call.1} parent=11 // pred_check_branch
          %308 = sbr.rel (%p306) target = $region36
        $region35: #{tpu_custom_call.1} parent=11 // pred_region
          _
        $region36: #{tpu_custom_call.1} parent=11 // pred_fallthru
          _
      $region12: #{tpu_custom_call.1} parent=5 // pred_fallthru
        _
      %p309 = scmp.lt.s32.totalorder %s20, 2
      // Predicated region
      $region37: #{tpu_custom_call.1} parent=5 // pred_check
        %p310 = pneg %p309
      $region38: #{tpu_custom_call.1} parent=5 // pred_check_branch
        %312 = sbr.rel (%p310) target = $region40
      $region39: #{tpu_custom_call.1} parent=5 // pred_region
        // Predicated region
        $region41: #{tpu_custom_call.1} parent=39 // pred_check
          %p313 = pneg %p40
        $region42: #{tpu_custom_call.1} parent=39 // pred_check_branch
          %315 = sbr.rel (%p313) target = $region44
        $region43: #{tpu_custom_call.1} parent=39 // pred_region
          %s316 = smul.u32 16, %s20
          %p317 = scmp.lt.s32.totalorder %s316, 31
          %s318 = scalar_select %p317, %s316, 31
          %s319 = smul.addr %s318, 8
          %s320 = scalar_lea.vmem %s0, %s319
          %s321 = smul.u32 16, %s20
        $region44: #{tpu_custom_call.1} parent=39 // pred_fallthru
          _
        // Predicated region
        $region45: #{tpu_custom_call.1} parent=39 // pred_check
          %p322 = pneg %p66
        $region46: #{tpu_custom_call.1} parent=39 // pred_check_branch
          %324 = sbr.rel (%p322) target = $region48
        $region47: #{tpu_custom_call.1} parent=39 // pred_region
          %s325 = smul.u32 16, %s20
          %p326 = scmp.lt.s32.totalorder %s325, 31
          %s327 = scalar_select %p326, %s325, 31
          %s328 = smul.addr %s327, 8
          %s329 = scalar_lea.vmem %s1, %s328
          %s330 = smul.u32 16, %s20
        $region48: #{tpu_custom_call.1} parent=39 // pred_fallthru
          _
        // Predicated region
        $region49: #{tpu_custom_call.1} parent=39 // pred_check
          %p331 = pneg %p92
        $region50: #{tpu_custom_call.1} parent=39 // pred_check_branch
          %333 = sbr.rel (%p331) target = $region52
        $region51: #{tpu_custom_call.1} parent=39 // pred_region
          %s334 = smul.u32 16, %s20
          %p335 = scmp.lt.s32.totalorder %s334, 31
          %s336 = scalar_select %p335, %s334, 31
          %s337 = smul.addr %s336, 8
          %s338 = scalar_lea.vmem %s2, %s337
          %s339 = smul.u32 16, %s20
        $region52: #{tpu_custom_call.1} parent=39 // pred_fallthru
          _
        // Predicated region
        $region53: #{tpu_custom_call.1} parent=39 // pred_check
          %p340 = pneg %p118
        $region54: #{tpu_custom_call.1} parent=39 // pred_check_branch
          %342 = sbr.rel (%p340) target = $region56
        $region55: #{tpu_custom_call.1} parent=39 // pred_region
          %s343 = smul.u32 16, %s20
          %p344 = scmp.lt.s32.totalorder %s343, 31
          %s345 = scalar_select %p344, %s343, 31
          %s346 = smul.addr %s345, 8
          %s347 = scalar_lea.vmem %s3, %s346
          %s348 = smul.u32 16, %s20
        $region56: #{tpu_custom_call.1} parent=39 // pred_fallthru
          _
      $region40: #{tpu_custom_call.1} parent=5 // pred_fallthru
        _
      %p349 = scmp.le.s32.totalorder 1, %s20
      %p350 = scmp.lt.s32.totalorder %s20, 3
      %p351 = pnand %p349, %p350
      %p352 = pneg %p351
      // Predicated region
      $region57: #{tpu_custom_call.1} parent=5 // pred_check
        _
      $region58: #{tpu_custom_call.1} parent=5 // pred_check_branch
        %354 = sbr.rel (%p351) target = $region60
      $region59: #{tpu_custom_call.1} parent=5 // pred_region
        %s355 = ssub.s32 %s20, 1
        %s356 = smul.u32 16, %s25
        %p357 = scmp.lt.s32.totalorder %s356, 31
        %s358 = scalar_select %p357, %s356, 31
        %s359 = smul.addr %s358, 8
        %s360 = scalar_lea.vmem %s0, %s359
        %p361 = pneg %p46
        %p362 = pneg %p43
        %s363 = smul.u32 16, %s25
        %p364 = scmp.lt.s32.totalorder %s363, 31
        %s365 = scalar_select %p364, %s363, 31
        %s366 = smul.addr %s365, 8
        %s367 = scalar_lea.vmem %s1, %s366
        %p368 = pneg %p72
        %p369 = pneg %p69
        %s370 = smul.u32 16, %s25
        %p371 = scmp.lt.s32.totalorder %s370, 31
        %s372 = scalar_select %p371, %s370, 31
        %s373 = smul.addr %s372, 8
        %s374 = scalar_lea.vmem %s2, %s373
        %p375 = pneg %p98
        %p376 = pneg %p95
        %s377 = smul.u32 16, %s25
        %p378 = scmp.lt.s32.totalorder %s377, 31
        %s379 = scalar_select %p378, %s377, 31
        %s380 = smul.addr %s379, 8
        %s381 = scalar_lea.vmem %s3, %s380
        %p382 = pneg %p124
        %p383 = pneg %p121
        %p384 = pneg %p145
        %p385 = pneg %p142
        %p386 = pneg %p166
        %p387 = pneg %p163
        %p388 = pneg %p187
        %p389 = pneg %p184
        %p390 = pneg %p208
        %p391 = pneg %p205
        %p392 = pneg %p229
        %p393 = pneg %p226
        %p394 = pneg %p250
        %p395 = pneg %p247
        %p396 = pneg %p276
        %p397 = pneg %p273
        %s398 = sand.u32 %s263, 1
        %s399 = scalar_lea.sflag [#allocation4], %s398
        %s400 = sand.u32 %s263, 1
        %s401 = scalar_lea.vmem [#allocation3], %s400
        %s402 = smul.u32 16, %s25
        %p403 = scmp.lt.s32.totalorder %s402, 31
        %s404 = scalar_select %p403, %s402, 31
        %s405 = smul.addr %s404, 8
        %s406 = scalar_lea.vmem %s0, %s405
        %s407 = smul.u32 16, %s25
        %s408 = smul.u32 16, %s25
        %p409 = scmp.lt.s32.totalorder %s408, 31
        %s410 = scalar_select %p409, %s408, 31
        %s411 = smul.addr %s410, 8
        %s412 = scalar_lea.vmem %s1, %s411
        %s413 = smul.u32 16, %s25
        %s414 = smul.u32 16, %s25
        %p415 = scmp.lt.s32.totalorder %s414, 31
        %s416 = scalar_select %p415, %s414, 31
        %s417 = smul.addr %s416, 8
        %s418 = scalar_lea.vmem %s2, %s417
        %s419 = smul.u32 16, %s25
        %s420 = smul.u32 16, %s25
        %p421 = scmp.lt.s32.totalorder %s420, 31
        %s422 = scalar_select %p421, %s420, 31
        %s423 = smul.addr %s422, 8
        %s424 = scalar_lea.vmem %s3, %s423
        %s425 = smul.u32 16, %s25
        %v427 = vld [vmem:[%s406] sm:$0xff]
        %v428 = vld [vmem:[%s406 + $0x8] sm:$0xff]
        %v429 = vld [vmem:[%s406 + $0x10] sm:$0xff]
        %v430 = vld [vmem:[%s406 + $0x18] sm:$0xff]
        %v431 = vld [vmem:[%s406 + $0x20] sm:$0xff]
        %v432 = vld [vmem:[%s406 + $0x28] sm:$0xff]
        %v433 = vld [vmem:[%s406 + $0x30] sm:$0xff]
        %v434 = vld [vmem:[%s406 + $0x38] sm:$0xff]
        %v435 = vld [vmem:[%s406 + $0x40] sm:$0xff]
        %v436 = vld [vmem:[%s406 + $0x48] sm:$0xff]
        %v437 = vld [vmem:[%s406 + $0x50] sm:$0xff]
        %v438 = vld [vmem:[%s406 + $0x58] sm:$0xff]
        %v439 = vld [vmem:[%s406 + $0x60] sm:$0xff]
        %v440 = vld [vmem:[%s406 + $0x68] sm:$0xff]
        %v441 = vld [vmem:[%s406 + $0x70] sm:$0xff]
        %v442 = vld [vmem:[%s406 + $0x78] sm:$0xff]
        %v443 = vxor.u32 %v427, 2147483648
        %v444 = vxor.u32 %v428, 2147483648
        %v445 = vxor.u32 %v429, 2147483648
        %v446 = vxor.u32 %v430, 2147483648
        %v447 = vxor.u32 %v431, 2147483648
        %v448 = vxor.u32 %v432, 2147483648
        %v449 = vxor.u32 %v433, 2147483648
        %v450 = vxor.u32 %v434, 2147483648
        %v451 = vxor.u32 %v435, 2147483648
        %v452 = vxor.u32 %v436, 2147483648
        %v453 = vxor.u32 %v437, 2147483648
        %v454 = vxor.u32 %v438, 2147483648
        %v455 = vxor.u32 %v439, 2147483648
        %v456 = vxor.u32 %v440, 2147483648
        %v457 = vxor.u32 %v441, 2147483648
        %v458 = vxor.u32 %v442, 2147483648
        %v459 = vmul.f32 %v443, 1.442695
        %v460 = vpow.pop %v459
        %v461 = vmul.f32 %v444, 1.442695
        %v462 = vpow.pop %v461
        %v463 = vmul.f32 %v445, 1.442695
        %v464 = vpow.pop %v463
        %v465 = vmul.f32 %v446, 1.442695
        %v466 = vpow.pop %v465
        %v467 = vmul.f32 %v447, 1.442695
        %v468 = vpow.pop %v467
        %v469 = vmul.f32 %v448, 1.442695
        %v470 = vpow.pop %v469
        %v471 = vmul.f32 %v449, 1.442695
        %v472 = vpow.pop %v471
        %v473 = vmul.f32 %v450, 1.442695
        %v474 = vpow.pop %v473
        %v475 = vmul.f32 %v451, 1.442695
        %v476 = vpow.pop %v475
        %v477 = vmul.f32 %v452, 1.442695
        %v478 = vpow.pop %v477
        %v479 = vmul.f32 %v453, 1.442695
        %v480 = vpow.pop %v479
        %v481 = vmul.f32 %v454, 1.442695
        %v482 = vpow.pop %v481
        %v483 = vmul.f32 %v455, 1.442695
        %v484 = vpow.pop %v483
        %v485 = vmul.f32 %v456, 1.442695
        %v486 = vpow.pop %v485
        %v487 = vmul.f32 %v457, 1.442695
        %v488 = vpow.pop %v487
        %v489 = vmul.f32 %v458, 1.442695
        %v490 = vpow.pop %v489
        %v491 = vadd.f32 %v460, 1.0
        %v492 = vadd.f32 %v462, 1.0
        %v493 = vadd.f32 %v464, 1.0
        %v494 = vadd.f32 %v466, 1.0
        %v495 = vadd.f32 %v468, 1.0
        %v496 = vadd.f32 %v470, 1.0
        %v497 = vadd.f32 %v472, 1.0
        %v498 = vadd.f32 %v474, 1.0
        %v499 = vadd.f32 %v476, 1.0
        %v500 = vadd.f32 %v478, 1.0
        %v501 = vadd.f32 %v480, 1.0
        %v502 = vadd.f32 %v482, 1.0
        %v503 = vadd.f32 %v484, 1.0
        %v504 = vadd.f32 %v486, 1.0
        %v505 = vadd.f32 %v488, 1.0
        %v506 = vadd.f32 %v490, 1.0
        %v507 = vrcp.pop %v491
        %v508 = vmul.f32 1.0, %v507
        %v509 = vrcp.pop %v492
        %v510 = vmul.f32 1.0, %v509
        %v511 = vrcp.pop %v493
        %v512 = vmul.f32 1.0, %v511
        %v513 = vrcp.pop %v494
        %v514 = vmul.f32 1.0, %v513
        %v515 = vrcp.pop %v495
        %v516 = vmul.f32 1.0, %v515
        %v517 = vrcp.pop %v496
        %v518 = vmul.f32 1.0, %v517
        %v519 = vrcp.pop %v497
        %v520 = vmul.f32 1.0, %v519
        %v521 = vrcp.pop %v498
        %v522 = vmul.f32 1.0, %v521
        %v523 = vrcp.pop %v499
        %v524 = vmul.f32 1.0, %v523
        %v525 = vrcp.pop %v500
        %v526 = vmul.f32 1.0, %v525
        %v527 = vrcp.pop %v501
        %v528 = vmul.f32 1.0, %v527
        %v529 = vrcp.pop %v502
        %v530 = vmul.f32 1.0, %v529
        %v531 = vrcp.pop %v503
        %v532 = vmul.f32 1.0, %v531
        %v533 = vrcp.pop %v504
        %v534 = vmul.f32 1.0, %v533
        %v535 = vrcp.pop %v505
        %v536 = vmul.f32 1.0, %v535
        %v537 = vrcp.pop %v506
        %v538 = vmul.f32 1.0, %v537
        %v539 = vld [vmem:[%s412] sm:$0xff]
        %v540 = vld [vmem:[%s412 + $0x8] sm:$0xff]
        %v541 = vld [vmem:[%s412 + $0x10] sm:$0xff]
        %v542 = vld [vmem:[%s412 + $0x18] sm:$0xff]
        %v543 = vld [vmem:[%s412 + $0x20] sm:$0xff]
        %v544 = vld [vmem:[%s412 + $0x28] sm:$0xff]
        %v545 = vld [vmem:[%s412 + $0x30] sm:$0xff]
        %v546 = vld [vmem:[%s412 + $0x38] sm:$0xff]
        %v547 = vld [vmem:[%s412 + $0x40] sm:$0xff]
        %v548 = vld [vmem:[%s412 + $0x48] sm:$0xff]
        %v549 = vld [vmem:[%s412 + $0x50] sm:$0xff]
        %v550 = vld [vmem:[%s412 + $0x58] sm:$0xff]
        %v551 = vld [vmem:[%s412 + $0x60] sm:$0xff]
        %v552 = vld [vmem:[%s412 + $0x68] sm:$0xff]
        %v553 = vld [vmem:[%s412 + $0x70] sm:$0xff]
        %v554 = vld [vmem:[%s412 + $0x78] sm:$0xff]
        %v555 = vxor.u32 %v539, 2147483648
        %v556 = vxor.u32 %v540, 2147483648
        %v557 = vxor.u32 %v541, 2147483648
        %v558 = vxor.u32 %v542, 2147483648
        %v559 = vxor.u32 %v543, 2147483648
        %v560 = vxor.u32 %v544, 2147483648
        %v561 = vxor.u32 %v545, 2147483648
        %v562 = vxor.u32 %v546, 2147483648
        %v563 = vxor.u32 %v547, 2147483648
        %v564 = vxor.u32 %v548, 2147483648
        %v565 = vxor.u32 %v549, 2147483648
        %v566 = vxor.u32 %v550, 2147483648
        %v567 = vxor.u32 %v551, 2147483648
        %v568 = vxor.u32 %v552, 2147483648
        %v569 = vxor.u32 %v553, 2147483648
        %v570 = vxor.u32 %v554, 2147483648
        %v571 = vmul.f32 %v555, 1.442695
        %v572 = vpow.pop %v571
        %v573 = vmul.f32 %v556, 1.442695
        %v574 = vpow.pop %v573
        %v575 = vmul.f32 %v557, 1.442695
        %v576 = vpow.pop %v575
        %v577 = vmul.f32 %v558, 1.442695
        %v578 = vpow.pop %v577
        %v579 = vmul.f32 %v559, 1.442695
        %v580 = vpow.pop %v579
        %v581 = vmul.f32 %v560, 1.442695
        %v582 = vpow.pop %v581
        %v583 = vmul.f32 %v561, 1.442695
        %v584 = vpow.pop %v583
        %v585 = vmul.f32 %v562, 1.442695
        %v586 = vpow.pop %v585
        %v587 = vmul.f32 %v563, 1.442695
        %v588 = vpow.pop %v587
        %v589 = vmul.f32 %v564, 1.442695
        %v590 = vpow.pop %v589
        %v591 = vmul.f32 %v565, 1.442695
        %v592 = vpow.pop %v591
        %v593 = vmul.f32 %v566, 1.442695
        %v594 = vpow.pop %v593
        %v595 = vmul.f32 %v567, 1.442695
        %v596 = vpow.pop %v595
        %v597 = vmul.f32 %v568, 1.442695
        %v598 = vpow.pop %v597
        %v599 = vmul.f32 %v569, 1.442695
        %v600 = vpow.pop %v599
        %v601 = vmul.f32 %v570, 1.442695
        %v602 = vpow.pop %v601
        %v603 = vadd.f32 %v572, 1.0
        %v604 = vadd.f32 %v574, 1.0
        %v605 = vadd.f32 %v576, 1.0
        %v606 = vadd.f32 %v578, 1.0
        %v607 = vadd.f32 %v580, 1.0
        %v608 = vadd.f32 %v582, 1.0
        %v609 = vadd.f32 %v584, 1.0
        %v610 = vadd.f32 %v586, 1.0
        %v611 = vadd.f32 %v588, 1.0
        %v612 = vadd.f32 %v590, 1.0
        %v613 = vadd.f32 %v592, 1.0
        %v614 = vadd.f32 %v594, 1.0
        %v615 = vadd.f32 %v596, 1.0
        %v616 = vadd.f32 %v598, 1.0
        %v617 = vadd.f32 %v600, 1.0
        %v618 = vadd.f32 %v602, 1.0
        %v619 = vrcp.pop %v603
        %v620 = vmul.f32 1.0, %v619
        %v621 = vrcp.pop %v604
        %v622 = vmul.f32 1.0, %v621
        %v623 = vrcp.pop %v605
        %v624 = vmul.f32 1.0, %v623
        %v625 = vrcp.pop %v606
        %v626 = vmul.f32 1.0, %v625
        %v627 = vrcp.pop %v607
        %v628 = vmul.f32 1.0, %v627
        %v629 = vrcp.pop %v608
        %v630 = vmul.f32 1.0, %v629
        %v631 = vrcp.pop %v609
        %v632 = vmul.f32 1.0, %v631
        %v633 = vrcp.pop %v610
        %v634 = vmul.f32 1.0, %v633
        %v635 = vrcp.pop %v611
        %v636 = vmul.f32 1.0, %v635
        %v637 = vrcp.pop %v612
        %v638 = vmul.f32 1.0, %v637
        %v639 = vrcp.pop %v613
        %v640 = vmul.f32 1.0, %v639
        %v641 = vrcp.pop %v614
        %v642 = vmul.f32 1.0, %v641
        %v643 = vrcp.pop %v615
        %v644 = vmul.f32 1.0, %v643
        %v645 = vrcp.pop %v616
        %v646 = vmul.f32 1.0, %v645
        %v647 = vrcp.pop %v617
        %v648 = vmul.f32 1.0, %v647
        %v649 = vrcp.pop %v618
        %v650 = vmul.f32 1.0, %v649
        %v651 = vld [vmem:[%s418] sm:$0xff]
        %v652 = vld [vmem:[%s418 + $0x8] sm:$0xff]
        %v653 = vld [vmem:[%s418 + $0x10] sm:$0xff]
        %v654 = vld [vmem:[%s418 + $0x18] sm:$0xff]
        %v655 = vld [vmem:[%s418 + $0x20] sm:$0xff]
        %v656 = vld [vmem:[%s418 + $0x28] sm:$0xff]
        %v657 = vld [vmem:[%s418 + $0x30] sm:$0xff]
        %v658 = vld [vmem:[%s418 + $0x38] sm:$0xff]
        %v659 = vld [vmem:[%s418 + $0x40] sm:$0xff]
        %v660 = vld [vmem:[%s418 + $0x48] sm:$0xff]
        %v661 = vld [vmem:[%s418 + $0x50] sm:$0xff]
        %v662 = vld [vmem:[%s418 + $0x58] sm:$0xff]
        %v663 = vld [vmem:[%s418 + $0x60] sm:$0xff]
        %v664 = vld [vmem:[%s418 + $0x68] sm:$0xff]
        %v665 = vld [vmem:[%s418 + $0x70] sm:$0xff]
        %v666 = vld [vmem:[%s418 + $0x78] sm:$0xff]
        %v667 = vxor.u32 %v651, 2147483648
        %v668 = vxor.u32 %v652, 2147483648
        %v669 = vxor.u32 %v653, 2147483648
        %v670 = vxor.u32 %v654, 2147483648
        %v671 = vxor.u32 %v655, 2147483648
        %v672 = vxor.u32 %v656, 2147483648
        %v673 = vxor.u32 %v657, 2147483648
        %v674 = vxor.u32 %v658, 2147483648
        %v675 = vxor.u32 %v659, 2147483648
        %v676 = vxor.u32 %v660, 2147483648
        %v677 = vxor.u32 %v661, 2147483648
        %v678 = vxor.u32 %v662, 2147483648
        %v679 = vxor.u32 %v663, 2147483648
        %v680 = vxor.u32 %v664, 2147483648
        %v681 = vxor.u32 %v665, 2147483648
        %v682 = vxor.u32 %v666, 2147483648
        %v683 = vmul.f32 %v667, 1.442695
        %v684 = vpow.pop %v683
        %v685 = vmul.f32 %v668, 1.442695
        %v686 = vpow.pop %v685
        %v687 = vmul.f32 %v669, 1.442695
        %v688 = vpow.pop %v687
        %v689 = vmul.f32 %v670, 1.442695
        %v690 = vpow.pop %v689
        %v691 = vmul.f32 %v671, 1.442695
        %v692 = vpow.pop %v691
        %v693 = vmul.f32 %v672, 1.442695
        %v694 = vpow.pop %v693
        %v695 = vmul.f32 %v673, 1.442695
        %v696 = vpow.pop %v695
        %v697 = vmul.f32 %v674, 1.442695
        %v698 = vpow.pop %v697
        %v699 = vmul.f32 %v675, 1.442695
        %v700 = vpow.pop %v699
        %v701 = vmul.f32 %v676, 1.442695
        %v702 = vpow.pop %v701
        %v703 = vmul.f32 %v677, 1.442695
        %v704 = vpow.pop %v703
        %v705 = vmul.f32 %v678, 1.442695
        %v706 = vpow.pop %v705
        %v707 = vmul.f32 %v679, 1.442695
        %v708 = vpow.pop %v707
        %v709 = vmul.f32 %v680, 1.442695
        %v710 = vpow.pop %v709
        %v711 = vmul.f32 %v681, 1.442695
        %v712 = vpow.pop %v711
        %v713 = vmul.f32 %v682, 1.442695
        %v714 = vpow.pop %v713
        %v715 = vadd.f32 %v684, 1.0
        %v716 = vadd.f32 %v686, 1.0
        %v717 = vadd.f32 %v688, 1.0
        %v718 = vadd.f32 %v690, 1.0
        %v719 = vadd.f32 %v692, 1.0
        %v720 = vadd.f32 %v694, 1.0
        %v721 = vadd.f32 %v696, 1.0
        %v722 = vadd.f32 %v698, 1.0
        %v723 = vadd.f32 %v700, 1.0
        %v724 = vadd.f32 %v702, 1.0
        %v725 = vadd.f32 %v704, 1.0
        %v726 = vadd.f32 %v706, 1.0
        %v727 = vadd.f32 %v708, 1.0
        %v728 = vadd.f32 %v710, 1.0
        %v729 = vadd.f32 %v712, 1.0
        %v730 = vadd.f32 %v714, 1.0
        %v731 = vrcp.pop %v715
        %v732 = vmul.f32 1.0, %v731
        %v733 = vrcp.pop %v716
        %v734 = vmul.f32 1.0, %v733
        %v735 = vrcp.pop %v717
        %v736 = vmul.f32 1.0, %v735
        %v737 = vrcp.pop %v718
        %v738 = vmul.f32 1.0, %v737
        %v739 = vrcp.pop %v719
        %v740 = vmul.f32 1.0, %v739
        %v741 = vrcp.pop %v720
        %v742 = vmul.f32 1.0, %v741
        %v743 = vrcp.pop %v721
        %v744 = vmul.f32 1.0, %v743
        %v745 = vrcp.pop %v722
        %v746 = vmul.f32 1.0, %v745
        %v747 = vrcp.pop %v723
        %v748 = vmul.f32 1.0, %v747
        %v749 = vrcp.pop %v724
        %v750 = vmul.f32 1.0, %v749
        %v751 = vrcp.pop %v725
        %v752 = vmul.f32 1.0, %v751
        %v753 = vrcp.pop %v726
        %v754 = vmul.f32 1.0, %v753
        %v755 = vrcp.pop %v727
        %v756 = vmul.f32 1.0, %v755
        %v757 = vrcp.pop %v728
        %v758 = vmul.f32 1.0, %v757
        %v759 = vrcp.pop %v729
        %v760 = vmul.f32 1.0, %v759
        %v761 = vrcp.pop %v730
        %v762 = vmul.f32 1.0, %v761
        %v763 = vmul.f32 %v732, 10.0
        %v764 = vmul.f32 %v734, 10.0
        %v765 = vmul.f32 %v736, 10.0
        %v766 = vmul.f32 %v738, 10.0
        %v767 = vmul.f32 %v740, 10.0
        %v768 = vmul.f32 %v742, 10.0
        %v769 = vmul.f32 %v744, 10.0
        %v770 = vmul.f32 %v746, 10.0
        %v771 = vmul.f32 %v748, 10.0
        %v772 = vmul.f32 %v750, 10.0
        %v773 = vmul.f32 %v752, 10.0
        %v774 = vmul.f32 %v754, 10.0
        %v775 = vmul.f32 %v756, 10.0
        %v776 = vmul.f32 %v758, 10.0
        %v777 = vmul.f32 %v760, 10.0
        %v778 = vmul.f32 %v762, 10.0
        %v779 = vsub.f32 %v508, %v620
        %v780 = vsub.f32 %v510, %v622
        %v781 = vsub.f32 %v512, %v624
        %v782 = vsub.f32 %v514, %v626
        %v783 = vsub.f32 %v516, %v628
        %v784 = vsub.f32 %v518, %v630
        %v785 = vsub.f32 %v520, %v632
        %v786 = vsub.f32 %v522, %v634
        %v787 = vsub.f32 %v524, %v636
        %v788 = vsub.f32 %v526, %v638
        %v789 = vsub.f32 %v528, %v640
        %v790 = vsub.f32 %v530, %v642
        %v791 = vsub.f32 %v532, %v644
        %v792 = vsub.f32 %v534, %v646
        %v793 = vsub.f32 %v536, %v648
        %v794 = vsub.f32 %v538, %v650
        %796 = vset.pattern.permute.xlu0 0
        %797 = vperm.xlu0 %796, %v763
        %v798 = vpop.permute.xlu0 %797
        %801 = vset.pattern.permute.xlu0 0
        %802 = vperm.xlu0 %801, %v764
        %v803 = vpop.permute.xlu0 %802
        %806 = vset.pattern.permute.xlu0 0
        %807 = vperm.xlu0 %806, %v765
        %v808 = vpop.permute.xlu0 %807
        %811 = vset.pattern.permute.xlu0 0
        %812 = vperm.xlu0 %811, %v766
        %v813 = vpop.permute.xlu0 %812
        %816 = vset.pattern.permute.xlu0 0
        %817 = vperm.xlu0 %816, %v767
        %v818 = vpop.permute.xlu0 %817
        %821 = vset.pattern.permute.xlu0 0
        %822 = vperm.xlu0 %821, %v768
        %v823 = vpop.permute.xlu0 %822
        %826 = vset.pattern.permute.xlu0 0
        %827 = vperm.xlu0 %826, %v769
        %v828 = vpop.permute.xlu0 %827
        %831 = vset.pattern.permute.xlu0 0
        %832 = vperm.xlu0 %831, %v770
        %v833 = vpop.permute.xlu0 %832
        %836 = vset.pattern.permute.xlu0 0
        %837 = vperm.xlu0 %836, %v771
        %v838 = vpop.permute.xlu0 %837
        %841 = vset.pattern.permute.xlu0 0
        %842 = vperm.xlu0 %841, %v772
        %v843 = vpop.permute.xlu0 %842
        %846 = vset.pattern.permute.xlu0 0
        %847 = vperm.xlu0 %846, %v773
        %v848 = vpop.permute.xlu0 %847
        %851 = vset.pattern.permute.xlu0 0
        %852 = vperm.xlu0 %851, %v774
        %v853 = vpop.permute.xlu0 %852
        %856 = vset.pattern.permute.xlu0 0
        %857 = vperm.xlu0 %856, %v775
        %v858 = vpop.permute.xlu0 %857
        %861 = vset.pattern.permute.xlu0 0
        %862 = vperm.xlu0 %861, %v776
        %v863 = vpop.permute.xlu0 %862
        %866 = vset.pattern.permute.xlu0 0
        %867 = vperm.xlu0 %866, %v777
        %v868 = vpop.permute.xlu0 %867
        %871 = vset.pattern.permute.xlu0 0
        %872 = vperm.xlu0 %871, %v778
        %v873 = vpop.permute.xlu0 %872
        %v875 = vmul.f32 %v798, %v779
        %v876 = vmul.f32 %v803, %v780
        %v877 = vmul.f32 %v808, %v781
        %v878 = vmul.f32 %v813, %v782
        %v879 = vmul.f32 %v818, %v783
        %v880 = vmul.f32 %v823, %v784
        %v881 = vmul.f32 %v828, %v785
        %v882 = vmul.f32 %v833, %v786
        %v883 = vmul.f32 %v838, %v787
        %v884 = vmul.f32 %v843, %v788
        %v885 = vmul.f32 %v848, %v789
        %v886 = vmul.f32 %v853, %v790
        %v887 = vmul.f32 %v858, %v791
        %v888 = vmul.f32 %v863, %v792
        %v889 = vmul.f32 %v868, %v793
        %v890 = vmul.f32 %v873, %v794
        %v891 = vld [vmem:[%s424] sm:$0xff]
        %v892 = vld [vmem:[%s424 + $0x8] sm:$0xff]
        %v893 = vld [vmem:[%s424 + $0x10] sm:$0xff]
        %v894 = vld [vmem:[%s424 + $0x18] sm:$0xff]
        %v895 = vld [vmem:[%s424 + $0x20] sm:$0xff]
        %v896 = vld [vmem:[%s424 + $0x28] sm:$0xff]
        %v897 = vld [vmem:[%s424 + $0x30] sm:$0xff]
        %v898 = vld [vmem:[%s424 + $0x38] sm:$0xff]
        %v899 = vld [vmem:[%s424 + $0x40] sm:$0xff]
        %v900 = vld [vmem:[%s424 + $0x48] sm:$0xff]
        %v901 = vld [vmem:[%s424 + $0x50] sm:$0xff]
        %v902 = vld [vmem:[%s424 + $0x58] sm:$0xff]
        %v903 = vld [vmem:[%s424 + $0x60] sm:$0xff]
        %v904 = vld [vmem:[%s424 + $0x68] sm:$0xff]
        %v905 = vld [vmem:[%s424 + $0x70] sm:$0xff]
        %v906 = vld [vmem:[%s424 + $0x78] sm:$0xff]
        %v907 = vmul.f32 %v875, %v891
        %v908 = vmul.f32 %v876, %v892
        %v909 = vmul.f32 %v877, %v893
        %v910 = vmul.f32 %v878, %v894
        %v911 = vmul.f32 %v879, %v895
        %v912 = vmul.f32 %v880, %v896
        %v913 = vmul.f32 %v881, %v897
        %v914 = vmul.f32 %v882, %v898
        %v915 = vmul.f32 %v883, %v899
        %v916 = vmul.f32 %v884, %v900
        %v917 = vmul.f32 %v885, %v901
        %v918 = vmul.f32 %v886, %v902
        %v919 = vmul.f32 %v887, %v903
        %v920 = vmul.f32 %v888, %v904
        %v921 = vmul.f32 %v889, %v905
        %v922 = vmul.f32 %v890, %v906
        %v923 = vpack.c.bf16 %v908, %v907
        %v924 = vpack.c.bf16 %v910, %v909
        %v925 = vpack.c.bf16 %v912, %v911
        %v926 = vpack.c.bf16 %v914, %v913
        %v927 = vpack.c.bf16 %v916, %v915
        %v928 = vpack.c.bf16 %v918, %v917
        %v929 = vpack.c.bf16 %v920, %v919
        %v930 = vpack.c.bf16 %v922, %v921
        %v931 = vld [vmem:[%s4] sm:$0xff]
        %v932 = vld [vmem:[%s4 + $0x8] sm:$0xff]
        %v933 = vld [vmem:[%s4 + $0x10] sm:$0xff]
        %v934 = vld [vmem:[%s4 + $0x18] sm:$0xff]
        %v935 = vld [vmem:[%s4 + $0x20] sm:$0xff]
        %v936 = vld [vmem:[%s4 + $0x28] sm:$0xff]
        %v937 = vld [vmem:[%s4 + $0x30] sm:$0xff]
        %v938 = vld [vmem:[%s4 + $0x38] sm:$0xff]
        %v939 = vld [vmem:[%s5] sm:$0xf]
        %v941 = vlaneseq
        %v942 = vshrl.u32 %v941, 7
        %v943 = vsub.s32 0, %v942
        %v944 = vrot.slane %v939, %v943
        %v945 = vlaneseq
        %v946 = vshrl.u32 %v945, 7
        %v947 = vsub.s32 1, %v946
        %v948 = vrot.slane %v939, %v947
        %v949 = vlaneseq
        %v950 = vshrl.u32 %v949, 7
        %v951 = vsub.s32 2, %v950
        %v952 = vrot.slane %v939, %v951
        %v953 = vlaneseq
        %v954 = vshrl.u32 %v953, 7
        %v955 = vsub.s32 3, %v954
        %v956 = vrot.slane %v939, %v955
        %v969 = vunpack.c.l.b16 %v931
        %v970 = vunpack.c.h.b16 %v931
        %v971 = vunpack.c.l.b16 %v932
        %v972 = vunpack.c.h.b16 %v932
        %v973 = vunpack.c.l.b16 %v933
        %v974 = vunpack.c.h.b16 %v933
        %v975 = vunpack.c.l.b16 %v934
        %v976 = vunpack.c.h.b16 %v934
        %v977 = vunpack.c.l.b16 %v935
        %v978 = vunpack.c.h.b16 %v935
        %v979 = vunpack.c.l.b16 %v936
        %v980 = vunpack.c.h.b16 %v936
        %v981 = vunpack.c.l.b16 %v937
        %v982 = vunpack.c.h.b16 %v937
        %v983 = vunpack.c.l.b16 %v938
        %v984 = vunpack.c.h.b16 %v938
        %v985 = vpack.c.b16 %v973, %v969
        %v986 = vpack.c.b16 %v974, %v970
        %v987 = vpack.c.b16 %v975, %v971
        %v988 = vpack.c.b16 %v976, %v972
        %v989 = vpack.c.b16 %v981, %v977
        %v990 = vpack.c.b16 %v982, %v978
        %v991 = vpack.c.b16 %v983, %v979
        %v992 = vpack.c.b16 %v984, %v980
        %vm1001 = vcmask 261120
        %v1003 = vsel %vm1001, %v923, 0
        %v1006 = vsel %vm1001, %v924, 0
        %v1009 = vsel %vm1001, %v925, 0
        %v1012 = vsel %vm1001, %v926, 0
        %v1015 = vsel %vm1001, %v927, 0
        %v1018 = vsel %vm1001, %v928, 0
        %v1021 = vsel %vm1001, %v929, 0
        %v1024 = vsel %vm1001, %v930, 0
        %1026 = vmatprep.subr.bf16.mxu0 %v986
        %1027 = vmatpush1.bf16.msra.mxu0 %v985
        %1028 = vmatprep.subr.bf16.mxu0 %v990
        %1029 = vmatpush1.bf16.msra.mxu0 %v989
        %1030 = vmatprep.subr.bf16.mxu0 0
        %1031 = vmatpush1.bf16.msra.mxu0 0
        %1032 = vmatprep.subr.bf16.mxu0 0
        %1033 = vmatpush1.bf16.msra.mxu0 0
        %1034 = vmatprep.subr.bf16.mxu0 0
        %1035 = vmatpush1.bf16.msra.mxu0 0
        %1036 = vmatprep.subr.bf16.mxu0 0
        %1037 = vmatpush1.bf16.msra.mxu0 0
        %1038 = vmatprep.subr.bf16.mxu0 0
        %1039 = vmatpush1.bf16.msra.mxu0 0
        %1040 = vmatprep.subr.bf16.mxu0 0
        %1041 = vmatpush1.bf16.msra.mxu0 0
        %1042 = vmatprep.subr.bf16.mxu0 0
        %1043 = vmatpush1.bf16.msra.mxu0 0
        %1044 = vmatprep.subr.bf16.mxu0 0
        %1045 = vmatpush1.bf16.msra.mxu0 0
        %1046 = vmatprep.subr.bf16.mxu0 0
        %1047 = vmatpush1.bf16.msra.mxu0 0
        %1048 = vmatprep.subr.bf16.mxu0 0
        %1049 = vmatpush1.bf16.msra.mxu0 0
        %1050 = vmatprep.subr.bf16.mxu0 0
        %1051 = vmatpush1.bf16.msra.mxu0 0
        %1052 = vmatprep.subr.bf16.mxu0 0
        %1053 = vmatpush1.bf16.msra.mxu0 0
        %1054 = vmatprep.subr.bf16.mxu0 0
        %1055 = vmatpush1.bf16.msra.mxu0 0
        %1056 = vmatprep.subr.bf16.mxu0 0
        %1057 = vmatpush1.bf16.msra.mxu0 0
        %1058 = vmatprep.mubr.bf16.mxu0 0
        %1059 = vmatmul.mubr.bf16.gmra.mrb[0].mxu0 %v1003
        %v1060 = vpop.f32.mrb[0].mxu0
        %v1061 = vadd.f32 %v944, %v1060
        %v1062 = vpop.f32.mrb[0].mxu0
        %v1063 = vadd.f32 %v948, %v1062
        %v1064 = vpop.f32.mrb[0].mxu0
        %v1065 = vadd.f32 %v944, %v1064
        %v1066 = vpop.f32.mrb[0].mxu0
        %v1067 = vadd.f32 %v948, %v1066
        %1068 = vmatprep.mubr.bf16.mxu0 0
        %1069 = vmatmul.mubr.bf16.gmra.mrb[0].mxu0 %v1006
        %v1070 = vpop.f32.mrb[0].mxu0
        %v1071 = vadd.f32 %v944, %v1070
        %v1072 = vpop.f32.mrb[0].mxu0
        %v1073 = vadd.f32 %v948, %v1072
        %v1074 = vpop.f32.mrb[0].mxu0
        %v1075 = vadd.f32 %v944, %v1074
        %v1076 = vpop.f32.mrb[0].mxu0
        %v1077 = vadd.f32 %v948, %v1076
        %1078 = vmatprep.mubr.bf16.mxu0 0
        %1079 = vmatmul.mubr.bf16.gmra.mrb[0].mxu0 %v1009
        %v1080 = vpop.f32.mrb[0].mxu0
        %v1081 = vadd.f32 %v944, %v1080
        %v1082 = vpop.f32.mrb[0].mxu0
        %v1083 = vadd.f32 %v948, %v1082
        %v1084 = vpop.f32.mrb[0].mxu0
        %v1085 = vadd.f32 %v944, %v1084
        %v1086 = vpop.f32.mrb[0].mxu0
        %v1087 = vadd.f32 %v948, %v1086
        %1088 = vmatprep.mubr.bf16.mxu0 0
        %1089 = vmatmul.mubr.bf16.gmra.mrb[0].mxu0 %v1012
        %v1090 = vpop.f32.mrb[0].mxu0
        %v1091 = vadd.f32 %v944, %v1090
        %v1092 = vpop.f32.mrb[0].mxu0
        %v1093 = vadd.f32 %v948, %v1092
        %v1094 = vpop.f32.mrb[0].mxu0
        %v1095 = vadd.f32 %v944, %v1094
        %v1096 = vpop.f32.mrb[0].mxu0
        %v1097 = vadd.f32 %v948, %v1096
        %1098 = vmatprep.mubr.bf16.mxu0 0
        %1099 = vmatmul.mubr.bf16.gmra.mrb[0].mxu0 %v1015
        %v1100 = vpop.f32.mrb[0].mxu0
        %v1101 = vadd.f32 %v944, %v1100
        %v1102 = vpop.f32.mrb[0].mxu0
        %v1103 = vadd.f32 %v948, %v1102
        %v1104 = vpop.f32.mrb[0].mxu0
        %v1105 = vadd.f32 %v944, %v1104
        %v1106 = vpop.f32.mrb[0].mxu0
        %v1107 = vadd.f32 %v948, %v1106
        %1108 = vmatprep.mubr.bf16.mxu0 0
        %1109 = vmatmul.mubr.bf16.gmra.mrb[0].mxu0 %v1018
        %v1110 = vpop.f32.mrb[0].mxu0
        %v1111 = vadd.f32 %v944, %v1110
        %v1112 = vpop.f32.mrb[0].mxu0
        %v1113 = vadd.f32 %v948, %v1112
        %v1114 = vpop.f32.mrb[0].mxu0
        %v1115 = vadd.f32 %v944, %v1114
        %v1116 = vpop.f32.mrb[0].mxu0
        %v1117 = vadd.f32 %v948, %v1116
        %1118 = vmatprep.mubr.bf16.mxu0 0
        %1119 = vmatmul.mubr.bf16.gmra.mrb[0].mxu0 %v1021
        %v1120 = vpop.f32.mrb[0].mxu0
        %v1121 = vadd.f32 %v944, %v1120
        %v1122 = vpop.f32.mrb[0].mxu0
        %v1123 = vadd.f32 %v948, %v1122
        %v1124 = vpop.f32.mrb[0].mxu0
        %v1125 = vadd.f32 %v944, %v1124
        %v1126 = vpop.f32.mrb[0].mxu0
        %v1127 = vadd.f32 %v948, %v1126
        %1128 = vmatprep.mubr.bf16.mxu0 0
        %1129 = vmatmul.mubr.bf16.gmra.mrb[0].mxu0 %v1024
        %v1130 = vpop.f32.mrb[0].mxu0
        %v1131 = vadd.f32 %v944, %v1130
        %v1132 = vpop.f32.mrb[0].mxu0
        %v1133 = vadd.f32 %v948, %v1132
        %v1134 = vpop.f32.mrb[0].mxu0
        %v1135 = vadd.f32 %v944, %v1134
        %v1136 = vpop.f32.mrb[0].mxu0
        %v1137 = vadd.f32 %v948, %v1136
        %1138 = vdwg.mxu0
        %1139 = vmatprep.subr.bf16.mxu0 %v988
        %1140 = vmatpush1.bf16.msra.mxu0 %v987
        %1141 = vmatprep.subr.bf16.mxu0 %v992
        %1142 = vmatpush1.bf16.msra.mxu0 %v991
        %1143 = vmatprep.subr.bf16.mxu0 0
        %1144 = vmatpush1.bf16.msra.mxu0 0
        %1145 = vmatprep.subr.bf16.mxu0 0
        %1146 = vmatpush1.bf16.msra.mxu0 0
        %1147 = vmatprep.subr.bf16.mxu0 0
        %1148 = vmatpush1.bf16.msra.mxu0 0
        %1149 = vmatprep.subr.bf16.mxu0 0
        %1150 = vmatpush1.bf16.msra.mxu0 0
        %1151 = vmatprep.subr.bf16.mxu0 0
        %1152 = vmatpush1.bf16.msra.mxu0 0
        %1153 = vmatprep.subr.bf16.mxu0 0
        %1154 = vmatpush1.bf16.msra.mxu0 0
        %1155 = vmatprep.subr.bf16.mxu0 0
        %1156 = vmatpush1.bf16.msra.mxu0 0
        %1157 = vmatprep.subr.bf16.mxu0 0
        %1158 = vmatpush1.bf16.msra.mxu0 0
        %1159 = vmatprep.subr.bf16.mxu0 0
        %1160 = vmatpush1.bf16.msra.mxu0 0
        %1161 = vmatprep.subr.bf16.mxu0 0
        %1162 = vmatpush1.bf16.msra.mxu0 0
        %1163 = vmatprep.subr.bf16.mxu0 0
        %1164 = vmatpush1.bf16.msra.mxu0 0
        %1165 = vmatprep.subr.bf16.mxu0 0
        %1166 = vmatpush1.bf16.msra.mxu0 0
        %1167 = vmatprep.subr.bf16.mxu0 0
        %1168 = vmatpush1.bf16.msra.mxu0 0
        %1169 = vmatprep.subr.bf16.mxu0 0
        %1170 = vmatpush1.bf16.msra.mxu0 0
        %1171 = vmatprep.mubr.bf16.mxu0 0
        %1172 = vmatmul.mubr.bf16.gmra.mrb[0].mxu0 %v1003
        %v1173 = vpop.f32.mrb[0].mxu0
        %v1174 = vadd.f32 %v952, %v1173
        %v1175 = vpop.f32.mrb[0].mxu0
        %v1176 = vadd.f32 %v956, %v1175
        %v1177 = vpop.f32.mrb[0].mxu0
        %v1178 = vadd.f32 %v952, %v1177
        %v1179 = vpop.f32.mrb[0].mxu0
        %v1180 = vadd.f32 %v956, %v1179
        %1181 = vmatprep.mubr.bf16.mxu0 0
        %1182 = vmatmul.mubr.bf16.gmra.mrb[0].mxu0 %v1006
        %v1183 = vpop.f32.mrb[0].mxu0
        %v1184 = vadd.f32 %v952, %v1183
        %v1185 = vpop.f32.mrb[0].mxu0
        %v1186 = vadd.f32 %v956, %v1185
        %v1187 = vpop.f32.mrb[0].mxu0
        %v1188 = vadd.f32 %v952, %v1187
        %v1189 = vpop.f32.mrb[0].mxu0
        %v1190 = vadd.f32 %v956, %v1189
        %1191 = vmatprep.mubr.bf16.mxu0 0
        %1192 = vmatmul.mubr.bf16.gmra.mrb[0].mxu0 %v1009
        %v1193 = vpop.f32.mrb[0].mxu0
        %v1194 = vadd.f32 %v952, %v1193
        %v1195 = vpop.f32.mrb[0].mxu0
        %v1196 = vadd.f32 %v956, %v1195
        %v1197 = vpop.f32.mrb[0].mxu0
        %v1198 = vadd.f32 %v952, %v1197
        %v1199 = vpop.f32.mrb[0].mxu0
        %v1200 = vadd.f32 %v956, %v1199
        %1201 = vmatprep.mubr.bf16.mxu0 0
        %1202 = vmatmul.mubr.bf16.gmra.mrb[0].mxu0 %v1012
        %v1203 = vpop.f32.mrb[0].mxu0
        %v1204 = vadd.f32 %v952, %v1203
        %v1205 = vpop.f32.mrb[0].mxu0
        %v1206 = vadd.f32 %v956, %v1205
        %v1207 = vpop.f32.mrb[0].mxu0
        %v1208 = vadd.f32 %v952, %v1207
        %v1209 = vpop.f32.mrb[0].mxu0
        %v1210 = vadd.f32 %v956, %v1209
        %1211 = vmatprep.mubr.bf16.mxu0 0
        %1212 = vmatmul.mubr.bf16.gmra.mrb[0].mxu0 %v1015
        %v1213 = vpop.f32.mrb[0].mxu0
        %v1214 = vadd.f32 %v952, %v1213
        %v1215 = vpop.f32.mrb[0].mxu0
        %v1216 = vadd.f32 %v956, %v1215
        %v1217 = vpop.f32.mrb[0].mxu0
        %v1218 = vadd.f32 %v952, %v1217
        %v1219 = vpop.f32.mrb[0].mxu0
        %v1220 = vadd.f32 %v956, %v1219
        %1221 = vmatprep.mubr.bf16.mxu0 0
        %1222 = vmatmul.mubr.bf16.gmra.mrb[0].mxu0 %v1018
        %v1223 = vpop.f32.mrb[0].mxu0
        %v1224 = vadd.f32 %v952, %v1223
        %v1225 = vpop.f32.mrb[0].mxu0
        %v1226 = vadd.f32 %v956, %v1225
        %v1227 = vpop.f32.mrb[0].mxu0
        %v1228 = vadd.f32 %v952, %v1227
        %v1229 = vpop.f32.mrb[0].mxu0
        %v1230 = vadd.f32 %v956, %v1229
        %1231 = vmatprep.mubr.bf16.mxu0 0
        %1232 = vmatmul.mubr.bf16.gmra.mrb[0].mxu0 %v1021
        %v1233 = vpop.f32.mrb[0].mxu0
        %v1234 = vadd.f32 %v952, %v1233
        %v1235 = vpop.f32.mrb[0].mxu0
        %v1236 = vadd.f32 %v956, %v1235
        %v1237 = vpop.f32.mrb[0].mxu0
        %v1238 = vadd.f32 %v952, %v1237
        %v1239 = vpop.f32.mrb[0].mxu0
        %v1240 = vadd.f32 %v956, %v1239
        %1241 = vmatprep.mubr.bf16.mxu0 0
        %1242 = vmatmul.mubr.bf16.gmra.mrb[0].mxu0 %v1024
        %v1243 = vpop.f32.mrb[0].mxu0
        %v1244 = vadd.f32 %v952, %v1243
        %v1245 = vpop.f32.mrb[0].mxu0
        %v1246 = vadd.f32 %v956, %v1245
        %v1247 = vpop.f32.mrb[0].mxu0
        %v1248 = vadd.f32 %v952, %v1247
        %v1249 = vpop.f32.mrb[0].mxu0
        %v1250 = vadd.f32 %v956, %v1249
        %1251 = vdwg.mxu0
        %v1252 = vxor.u32 %v1061, 2147483648
        %v1253 = vxor.u32 %v1063, 2147483648
        %v1254 = vxor.u32 %v1174, 2147483648
        %v1255 = vxor.u32 %v1176, 2147483648
        %v1256 = vxor.u32 %v1065, 2147483648
        %v1257 = vxor.u32 %v1067, 2147483648
        %v1258 = vxor.u32 %v1178, 2147483648
        %v1259 = vxor.u32 %v1180, 2147483648
        %v1260 = vxor.u32 %v1071, 2147483648
        %v1261 = vxor.u32 %v1073, 2147483648
        %v1262 = vxor.u32 %v1184, 2147483648
        %v1263 = vxor.u32 %v1186, 2147483648
        %v1264 = vxor.u32 %v1075, 2147483648
        %v1265 = vxor.u32 %v1077, 2147483648
        %v1266 = vxor.u32 %v1188, 2147483648
        %v1267 = vxor.u32 %v1190, 2147483648
        %v1268 = vxor.u32 %v1081, 2147483648
        %v1269 = vxor.u32 %v1083, 2147483648
        %v1270 = vxor.u32 %v1194, 2147483648
        %v1271 = vxor.u32 %v1196, 2147483648
        %v1272 = vxor.u32 %v1085, 2147483648
        %v1273 = vxor.u32 %v1087, 2147483648
        %v1274 = vxor.u32 %v1198, 2147483648
        %v1275 = vxor.u32 %v1200, 2147483648
        %v1276 = vxor.u32 %v1091, 2147483648
        %v1277 = vxor.u32 %v1093, 2147483648
        %v1278 = vxor.u32 %v1204, 2147483648
        %v1279 = vxor.u32 %v1206, 2147483648
        %v1280 = vxor.u32 %v1095, 2147483648
        %v1281 = vxor.u32 %v1097, 2147483648
        %v1282 = vxor.u32 %v1208, 2147483648
        %v1283 = vxor.u32 %v1210, 2147483648
        %v1284 = vxor.u32 %v1101, 2147483648
        %v1285 = vxor.u32 %v1103, 2147483648
        %v1286 = vxor.u32 %v1214, 2147483648
        %v1287 = vxor.u32 %v1216, 2147483648
        %v1288 = vxor.u32 %v1105, 2147483648
        %v1289 = vxor.u32 %v1107, 2147483648
        %v1290 = vxor.u32 %v1218, 2147483648
        %v1291 = vxor.u32 %v1220, 2147483648
        %v1292 = vxor.u32 %v1111, 2147483648
        %v1293 = vxor.u32 %v1113, 2147483648
        %v1294 = vxor.u32 %v1224, 2147483648
        %v1295 = vxor.u32 %v1226, 2147483648
        %v1296 = vxor.u32 %v1115, 2147483648
        %v1297 = vxor.u32 %v1117, 2147483648
        %v1298 = vxor.u32 %v1228, 2147483648
        %v1299 = vxor.u32 %v1230, 2147483648
        %v1300 = vxor.u32 %v1121, 2147483648
        %v1301 = vxor.u32 %v1123, 2147483648
        %v1302 = vxor.u32 %v1234, 2147483648
        %v1303 = vxor.u32 %v1236, 2147483648
        %v1304 = vxor.u32 %v1125, 2147483648
        %v1305 = vxor.u32 %v1127, 2147483648
        %v1306 = vxor.u32 %v1238, 2147483648
        %v1307 = vxor.u32 %v1240, 2147483648
        %v1308 = vxor.u32 %v1131, 2147483648
        %v1309 = vxor.u32 %v1133, 2147483648
        %v1310 = vxor.u32 %v1244, 2147483648
        %v1311 = vxor.u32 %v1246, 2147483648
        %v1312 = vxor.u32 %v1135, 2147483648
        %v1313 = vxor.u32 %v1137, 2147483648
        %v1314 = vxor.u32 %v1248, 2147483648
        %v1315 = vxor.u32 %v1250, 2147483648
        %v1316 = vmul.f32 %v1252, 1.442695
        %v1317 = vpow.pop %v1316
        %v1318 = vmul.f32 %v1253, 1.442695
        %v1319 = vpow.pop %v1318
        %v1320 = vmul.f32 %v1254, 1.442695
        %v1321 = vpow.pop %v1320
        %v1322 = vmul.f32 %v1255, 1.442695
        %v1323 = vpow.pop %v1322
        %v1324 = vmul.f32 %v1256, 1.442695
        %v1325 = vpow.pop %v1324
        %v1326 = vmul.f32 %v1257, 1.442695
        %v1327 = vpow.pop %v1326
        %v1328 = vmul.f32 %v1258, 1.442695
        %v1329 = vpow.pop %v1328
        %v1330 = vmul.f32 %v1259, 1.442695
        %v1331 = vpow.pop %v1330
        %v1332 = vmul.f32 %v1260, 1.442695
        %v1333 = vpow.pop %v1332
        %v1334 = vmul.f32 %v1261, 1.442695
        %v1335 = vpow.pop %v1334
        %v1336 = vmul.f32 %v1262, 1.442695
        %v1337 = vpow.pop %v1336
        %v1338 = vmul.f32 %v1263, 1.442695
        %v1339 = vpow.pop %v1338
        %v1340 = vmul.f32 %v1264, 1.442695
        %v1341 = vpow.pop %v1340
        %v1342 = vmul.f32 %v1265, 1.442695
        %v1343 = vpow.pop %v1342
        %v1344 = vmul.f32 %v1266, 1.442695
        %v1345 = vpow.pop %v1344
        %v1346 = vmul.f32 %v1267, 1.442695
        %v1347 = vpow.pop %v1346
        %v1348 = vmul.f32 %v1268, 1.442695
        %v1349 = vpow.pop %v1348
        %v1350 = vmul.f32 %v1269, 1.442695
        %v1351 = vpow.pop %v1350
        %v1352 = vmul.f32 %v1270, 1.442695
        %v1353 = vpow.pop %v1352
        %v1354 = vmul.f32 %v1271, 1.442695
        %v1355 = vpow.pop %v1354
        %v1356 = vmul.f32 %v1272, 1.442695
        %v1357 = vpow.pop %v1356
        %v1358 = vmul.f32 %v1273, 1.442695
        %v1359 = vpow.pop %v1358
        %v1360 = vmul.f32 %v1274, 1.442695
        %v1361 = vpow.pop %v1360
        %v1362 = vmul.f32 %v1275, 1.442695
        %v1363 = vpow.pop %v1362
        %v1364 = vmul.f32 %v1276, 1.442695
        %v1365 = vpow.pop %v1364
        %v1366 = vmul.f32 %v1277, 1.442695
        %v1367 = vpow.pop %v1366
        %v1368 = vmul.f32 %v1278, 1.442695
        %v1369 = vpow.pop %v1368
        %v1370 = vmul.f32 %v1279, 1.442695
        %v1371 = vpow.pop %v1370
        %v1372 = vmul.f32 %v1280, 1.442695
        %v1373 = vpow.pop %v1372
        %v1374 = vmul.f32 %v1281, 1.442695
        %v1375 = vpow.pop %v1374
        %v1376 = vmul.f32 %v1282, 1.442695
        %v1377 = vpow.pop %v1376
        %v1378 = vmul.f32 %v1283, 1.442695
        %v1379 = vpow.pop %v1378
        %v1380 = vmul.f32 %v1284, 1.442695
        %v1381 = vpow.pop %v1380
        %v1382 = vmul.f32 %v1285, 1.442695
        %v1383 = vpow.pop %v1382
        %v1384 = vmul.f32 %v1286, 1.442695
        %v1385 = vpow.pop %v1384
        %v1386 = vmul.f32 %v1287, 1.442695
        %v1387 = vpow.pop %v1386
        %v1388 = vmul.f32 %v1288, 1.442695
        %v1389 = vpow.pop %v1388
        %v1390 = vmul.f32 %v1289, 1.442695
        %v1391 = vpow.pop %v1390
        %v1392 = vmul.f32 %v1290, 1.442695
        %v1393 = vpow.pop %v1392
        %v1394 = vmul.f32 %v1291, 1.442695
        %v1395 = vpow.pop %v1394
        %v1396 = vmul.f32 %v1292, 1.442695
        %v1397 = vpow.pop %v1396
        %v1398 = vmul.f32 %v1293, 1.442695
        %v1399 = vpow.pop %v1398
        %v1400 = vmul.f32 %v1294, 1.442695
        %v1401 = vpow.pop %v1400
        %v1402 = vmul.f32 %v1295, 1.442695
        %v1403 = vpow.pop %v1402
        %v1404 = vmul.f32 %v1296, 1.442695
        %v1405 = vpow.pop %v1404
        %v1406 = vmul.f32 %v1297, 1.442695
        %v1407 = vpow.pop %v1406
        %v1408 = vmul.f32 %v1298, 1.442695
        %v1409 = vpow.pop %v1408
        %v1410 = vmul.f32 %v1299, 1.442695
        %v1411 = vpow.pop %v1410
        %v1412 = vmul.f32 %v1300, 1.442695
        %v1413 = vpow.pop %v1412
        %v1414 = vmul.f32 %v1301, 1.442695
        %v1415 = vpow.pop %v1414
        %v1416 = vmul.f32 %v1302, 1.442695
        %v1417 = vpow.pop %v1416
        %v1418 = vmul.f32 %v1303, 1.442695
        %v1419 = vpow.pop %v1418
        %v1420 = vmul.f32 %v1304, 1.442695
        %v1421 = vpow.pop %v1420
        %v1422 = vmul.f32 %v1305, 1.442695
        %v1423 = vpow.pop %v1422
        %v1424 = vmul.f32 %v1306, 1.442695
        %v1425 = vpow.pop %v1424
        %v1426 = vmul.f32 %v1307, 1.442695
        %v1427 = vpow.pop %v1426
        %v1428 = vmul.f32 %v1308, 1.442695
        %v1429 = vpow.pop %v1428
        %v1430 = vmul.f32 %v1309, 1.442695
        %v1431 = vpow.pop %v1430
        %v1432 = vmul.f32 %v1310, 1.442695
        %v1433 = vpow.pop %v1432
        %v1434 = vmul.f32 %v1311, 1.442695
        %v1435 = vpow.pop %v1434
        %v1436 = vmul.f32 %v1312, 1.442695
        %v1437 = vpow.pop %v1436
        %v1438 = vmul.f32 %v1313, 1.442695
        %v1439 = vpow.pop %v1438
        %v1440 = vmul.f32 %v1314, 1.442695
        %v1441 = vpow.pop %v1440
        %v1442 = vmul.f32 %v1315, 1.442695
        %v1443 = vpow.pop %v1442
        %v1444 = vadd.f32 %v1317, 1.0
        %v1445 = vadd.f32 %v1319, 1.0
        %v1446 = vadd.f32 %v1321, 1.0
        %v1447 = vadd.f32 %v1323, 1.0
        %v1448 = vadd.f32 %v1325, 1.0
        %v1449 = vadd.f32 %v1327, 1.0
        %v1450 = vadd.f32 %v1329, 1.0
        %v1451 = vadd.f32 %v1331, 1.0
        %v1452 = vadd.f32 %v1333, 1.0
        %v1453 = vadd.f32 %v1335, 1.0
        %v1454 = vadd.f32 %v1337, 1.0
        %v1455 = vadd.f32 %v1339, 1.0
        %v1456 = vadd.f32 %v1341, 1.0
        %v1457 = vadd.f32 %v1343, 1.0
        %v1458 = vadd.f32 %v1345, 1.0
        %v1459 = vadd.f32 %v1347, 1.0
        %v1460 = vadd.f32 %v1349, 1.0
        %v1461 = vadd.f32 %v1351, 1.0
        %v1462 = vadd.f32 %v1353, 1.0
        %v1463 = vadd.f32 %v1355, 1.0
        %v1464 = vadd.f32 %v1357, 1.0
        %v1465 = vadd.f32 %v1359, 1.0
        %v1466 = vadd.f32 %v1361, 1.0
        %v1467 = vadd.f32 %v1363, 1.0
        %v1468 = vadd.f32 %v1365, 1.0
        %v1469 = vadd.f32 %v1367, 1.0
        %v1470 = vadd.f32 %v1369, 1.0
        %v1471 = vadd.f32 %v1371, 1.0
        %v1472 = vadd.f32 %v1373, 1.0
        %v1473 = vadd.f32 %v1375, 1.0
        %v1474 = vadd.f32 %v1377, 1.0
        %v1475 = vadd.f32 %v1379, 1.0
        %v1476 = vadd.f32 %v1381, 1.0
        %v1477 = vadd.f32 %v1383, 1.0
        %v1478 = vadd.f32 %v1385, 1.0
        %v1479 = vadd.f32 %v1387, 1.0
        %v1480 = vadd.f32 %v1389, 1.0
        %v1481 = vadd.f32 %v1391, 1.0
        %v1482 = vadd.f32 %v1393, 1.0
        %v1483 = vadd.f32 %v1395, 1.0
        %v1484 = vadd.f32 %v1397, 1.0
        %v1485 = vadd.f32 %v1399, 1.0
        %v1486 = vadd.f32 %v1401, 1.0
        %v1487 = vadd.f32 %v1403, 1.0
        %v1488 = vadd.f32 %v1405, 1.0
        %v1489 = vadd.f32 %v1407, 1.0
        %v1490 = vadd.f32 %v1409, 1.0
        %v1491 = vadd.f32 %v1411, 1.0
        %v1492 = vadd.f32 %v1413, 1.0
        %v1493 = vadd.f32 %v1415, 1.0
        %v1494 = vadd.f32 %v1417, 1.0
        %v1495 = vadd.f32 %v1419, 1.0
        %v1496 = vadd.f32 %v1421, 1.0
        %v1497 = vadd.f32 %v1423, 1.0
        %v1498 = vadd.f32 %v1425, 1.0
        %v1499 = vadd.f32 %v1427, 1.0
        %v1500 = vadd.f32 %v1429, 1.0
        %v1501 = vadd.f32 %v1431, 1.0
        %v1502 = vadd.f32 %v1433, 1.0
        %v1503 = vadd.f32 %v1435, 1.0
        %v1504 = vadd.f32 %v1437, 1.0
        %v1505 = vadd.f32 %v1439, 1.0
        %v1506 = vadd.f32 %v1441, 1.0
        %v1507 = vadd.f32 %v1443, 1.0
        %v1508 = vrcp.pop %v1444
        %v1509 = vmul.f32 1.0, %v1508
        %v1510 = vrcp.pop %v1445
        %v1511 = vmul.f32 1.0, %v1510
        %v1512 = vrcp.pop %v1446
        %v1513 = vmul.f32 1.0, %v1512
        %v1514 = vrcp.pop %v1447
        %v1515 = vmul.f32 1.0, %v1514
        %v1516 = vrcp.pop %v1448
        %v1517 = vmul.f32 1.0, %v1516
        %v1518 = vrcp.pop %v1449
        %v1519 = vmul.f32 1.0, %v1518
        %v1520 = vrcp.pop %v1450
        %v1521 = vmul.f32 1.0, %v1520
        %v1522 = vrcp.pop %v1451
        %v1523 = vmul.f32 1.0, %v1522
        %v1524 = vrcp.pop %v1452
        %v1525 = vmul.f32 1.0, %v1524
        %v1526 = vrcp.pop %v1453
        %v1527 = vmul.f32 1.0, %v1526
        %v1528 = vrcp.pop %v1454
        %v1529 = vmul.f32 1.0, %v1528
        %v1530 = vrcp.pop %v1455
        %v1531 = vmul.f32 1.0, %v1530
        %v1532 = vrcp.pop %v1456
        %v1533 = vmul.f32 1.0, %v1532
        %v1534 = vrcp.pop %v1457
        %v1535 = vmul.f32 1.0, %v1534
        %v1536 = vrcp.pop %v1458
        %v1537 = vmul.f32 1.0, %v1536
        %v1538 = vrcp.pop %v1459
        %v1539 = vmul.f32 1.0, %v1538
        %v1540 = vrcp.pop %v1460
        %v1541 = vmul.f32 1.0, %v1540
        %v1542 = vrcp.pop %v1461
        %v1543 = vmul.f32 1.0, %v1542
        %v1544 = vrcp.pop %v1462
        %v1545 = vmul.f32 1.0, %v1544
        %v1546 = vrcp.pop %v1463
        %v1547 = vmul.f32 1.0, %v1546
        %v1548 = vrcp.pop %v1464
        %v1549 = vmul.f32 1.0, %v1548
        %v1550 = vrcp.pop %v1465
        %v1551 = vmul.f32 1.0, %v1550
        %v1552 = vrcp.pop %v1466
        %v1553 = vmul.f32 1.0, %v1552
        %v1554 = vrcp.pop %v1467
        %v1555 = vmul.f32 1.0, %v1554
        %v1556 = vrcp.pop %v1468
        %v1557 = vmul.f32 1.0, %v1556
        %v1558 = vrcp.pop %v1469
        %v1559 = vmul.f32 1.0, %v1558
        %v1560 = vrcp.pop %v1470
        %v1561 = vmul.f32 1.0, %v1560
        %v1562 = vrcp.pop %v1471
        %v1563 = vmul.f32 1.0, %v1562
        %v1564 = vrcp.pop %v1472
        %v1565 = vmul.f32 1.0, %v1564
        %v1566 = vrcp.pop %v1473
        %v1567 = vmul.f32 1.0, %v1566
        %v1568 = vrcp.pop %v1474
        %v1569 = vmul.f32 1.0, %v1568
        %v1570 = vrcp.pop %v1475
        %v1571 = vmul.f32 1.0, %v1570
        %v1572 = vrcp.pop %v1476
        %v1573 = vmul.f32 1.0, %v1572
        %v1574 = vrcp.pop %v1477
        %v1575 = vmul.f32 1.0, %v1574
        %v1576 = vrcp.pop %v1478
        %v1577 = vmul.f32 1.0, %v1576
        %v1578 = vrcp.pop %v1479
        %v1579 = vmul.f32 1.0, %v1578
        %v1580 = vrcp.pop %v1480
        %v1581 = vmul.f32 1.0, %v1580
        %v1582 = vrcp.pop %v1481
        %v1583 = vmul.f32 1.0, %v1582
        %v1584 = vrcp.pop %v1482
        %v1585 = vmul.f32 1.0, %v1584
        %v1586 = vrcp.pop %v1483
        %v1587 = vmul.f32 1.0, %v1586
        %v1588 = vrcp.pop %v1484
        %v1589 = vmul.f32 1.0, %v1588
        %v1590 = vrcp.pop %v1485
        %v1591 = vmul.f32 1.0, %v1590
        %v1592 = vrcp.pop %v1486
        %v1593 = vmul.f32 1.0, %v1592
        %v1594 = vrcp.pop %v1487
        %v1595 = vmul.f32 1.0, %v1594
        %v1596 = vrcp.pop %v1488
        %v1597 = vmul.f32 1.0, %v1596
        %v1598 = vrcp.pop %v1489
        %v1599 = vmul.f32 1.0, %v1598
        %v1600 = vrcp.pop %v1490
        %v1601 = vmul.f32 1.0, %v1600
        %v1602 = vrcp.pop %v1491
        %v1603 = vmul.f32 1.0, %v1602
        %v1604 = vrcp.pop %v1492
        %v1605 = vmul.f32 1.0, %v1604
        %v1606 = vrcp.pop %v1493
        %v1607 = vmul.f32 1.0, %v1606
        %v1608 = vrcp.pop %v1494
        %v1609 = vmul.f32 1.0, %v1608
        %v1610 = vrcp.pop %v1495
        %v1611 = vmul.f32 1.0, %v1610
        %v1612 = vrcp.pop %v1496
        %v1613 = vmul.f32 1.0, %v1612
        %v1614 = vrcp.pop %v1497
        %v1615 = vmul.f32 1.0, %v1614
        %v1616 = vrcp.pop %v1498
        %v1617 = vmul.f32 1.0, %v1616
        %v1618 = vrcp.pop %v1499
        %v1619 = vmul.f32 1.0, %v1618
        %v1620 = vrcp.pop %v1500
        %v1621 = vmul.f32 1.0, %v1620
        %v1622 = vrcp.pop %v1501
        %v1623 = vmul.f32 1.0, %v1622
        %v1624 = vrcp.pop %v1502
        %v1625 = vmul.f32 1.0, %v1624
        %v1626 = vrcp.pop %v1503
        %v1627 = vmul.f32 1.0, %v1626
        %v1628 = vrcp.pop %v1504
        %v1629 = vmul.f32 1.0, %v1628
        %v1630 = vrcp.pop %v1505
        %v1631 = vmul.f32 1.0, %v1630
        %v1632 = vrcp.pop %v1506
        %v1633 = vmul.f32 1.0, %v1632
        %v1634 = vrcp.pop %v1507
        %v1635 = vmul.f32 1.0, %v1634
        %v1636 = vpack.c.bf16 %v1517, %v1509
        %v1637 = vpack.c.bf16 %v1519, %v1511
        %v1638 = vpack.c.bf16 %v1521, %v1513
        %v1639 = vpack.c.bf16 %v1523, %v1515
        %v1640 = vpack.c.bf16 %v1533, %v1525
        %v1641 = vpack.c.bf16 %v1535, %v1527
        %v1642 = vpack.c.bf16 %v1537, %v1529
        %v1643 = vpack.c.bf16 %v1539, %v1531
        %v1644 = vpack.c.bf16 %v1549, %v1541
        %v1645 = vpack.c.bf16 %v1551, %v1543
        %v1646 = vpack.c.bf16 %v1553, %v1545
        %v1647 = vpack.c.bf16 %v1555, %v1547
        %v1648 = vpack.c.bf16 %v1565, %v1557
        %v1649 = vpack.c.bf16 %v1567, %v1559
        %v1650 = vpack.c.bf16 %v1569, %v1561
        %v1651 = vpack.c.bf16 %v1571, %v1563
        %v1652 = vpack.c.bf16 %v1581, %v1573
        %v1653 = vpack.c.bf16 %v1583, %v1575
        %v1654 = vpack.c.bf16 %v1585, %v1577
        %v1655 = vpack.c.bf16 %v1587, %v1579
        %v1656 = vpack.c.bf16 %v1597, %v1589
        %v1657 = vpack.c.bf16 %v1599, %v1591
        %v1658 = vpack.c.bf16 %v1601, %v1593
        %v1659 = vpack.c.bf16 %v1603, %v1595
        %v1660 = vpack.c.bf16 %v1613, %v1605
        %v1661 = vpack.c.bf16 %v1615, %v1607
        %v1662 = vpack.c.bf16 %v1617, %v1609
        %v1663 = vpack.c.bf16 %v1619, %v1611
        %v1664 = vpack.c.bf16 %v1629, %v1621
        %v1665 = vpack.c.bf16 %v1631, %v1623
        %v1666 = vpack.c.bf16 %v1633, %v1625
        %v1667 = vpack.c.bf16 %v1635, %v1627
        %v1668 = vld [vmem:[%s6] sm:$0xff]
        %v1669 = vld [vmem:[%s6 + $0x8] sm:$0xff]
        %v1670 = vld [vmem:[%s6 + $0x10] sm:$0xff]
        %v1671 = vld [vmem:[%s6 + $0x18] sm:$0xff]
        %v1672 = vld [vmem:[%s6 + $0x20] sm:$0xff]
        %v1673 = vld [vmem:[%s6 + $0x28] sm:$0xff]
        %v1674 = vld [vmem:[%s6 + $0x30] sm:$0xff]
        %v1675 = vld [vmem:[%s6 + $0x38] sm:$0xff]
        %v1676 = vld [vmem:[%s6 + $0x40] sm:$0xff]
        %v1677 = vld [vmem:[%s6 + $0x48] sm:$0xff]
        %v1678 = vld [vmem:[%s6 + $0x50] sm:$0xff]
        %v1679 = vld [vmem:[%s6 + $0x58] sm:$0xff]
        %v1680 = vld [vmem:[%s6 + $0x60] sm:$0xff]
        %v1681 = vld [vmem:[%s6 + $0x68] sm:$0xff]
        %v1682 = vld [vmem:[%s6 + $0x70] sm:$0xff]
        %v1683 = vld [vmem:[%s6 + $0x78] sm:$0xff]
        %v1684 = vld [vmem:[%s6 + $0x80] sm:$0xff]
        %v1685 = vld [vmem:[%s6 + $0x88] sm:$0xff]
        %v1686 = vld [vmem:[%s6 + $0x90] sm:$0xff]
        %v1687 = vld [vmem:[%s6 + $0x98] sm:$0xff]
        %v1688 = vld [vmem:[%s6 + $0xa0] sm:$0xff]
        %v1689 = vld [vmem:[%s6 + $0xa8] sm:$0xff]
        %v1690 = vld [vmem:[%s6 + $0xb0] sm:$0xff]
        %v1691 = vld [vmem:[%s6 + $0xb8] sm:$0xff]
        %v1692 = vld [vmem:[%s6 + $0xc0] sm:$0xff]
        %v1693 = vld [vmem:[%s6 + $0xc8] sm:$0xff]
        %v1694 = vld [vmem:[%s6 + $0xd0] sm:$0xff]
        %v1695 = vld [vmem:[%s6 + $0xd8] sm:$0xff]
        %v1696 = vld [vmem:[%s6 + $0xe0] sm:$0xff]
        %v1697 = vld [vmem:[%s6 + $0xe8] sm:$0xff]
        %v1698 = vld [vmem:[%s6 + $0xf0] sm:$0xff]
        %v1699 = vld [vmem:[%s6 + $0xf8] sm:$0xff]
        %v1700 = vld [vmem:[%s6 + $0x100] sm:$0xff]
        %v1701 = vld [vmem:[%s6 + $0x108] sm:$0xff]
        %v1702 = vld [vmem:[%s6 + $0x110] sm:$0xff]
        %v1703 = vld [vmem:[%s6 + $0x118] sm:$0xff]
        %v1704 = vld [vmem:[%s6 + $0x120] sm:$0xff]
        %v1705 = vld [vmem:[%s6 + $0x128] sm:$0xff]
        %v1706 = vld [vmem:[%s6 + $0x130] sm:$0xff]
        %v1707 = vld [vmem:[%s6 + $0x138] sm:$0xff]
        %v1708 = vld [vmem:[%s6 + $0x140] sm:$0xff]
        %v1709 = vld [vmem:[%s6 + $0x148] sm:$0xff]
        %v1710 = vld [vmem:[%s6 + $0x150] sm:$0xff]
        %v1711 = vld [vmem:[%s6 + $0x158] sm:$0xff]
        %v1712 = vld [vmem:[%s6 + $0x160] sm:$0xff]
        %v1713 = vld [vmem:[%s6 + $0x168] sm:$0xff]
        %v1714 = vld [vmem:[%s6 + $0x170] sm:$0xff]
        %v1715 = vld [vmem:[%s6 + $0x178] sm:$0xff]
        %v1716 = vld [vmem:[%s6 + $0x180] sm:$0xff]
        %v1717 = vld [vmem:[%s6 + $0x188] sm:$0xff]
        %v1718 = vld [vmem:[%s6 + $0x190] sm:$0xff]
        %v1719 = vld [vmem:[%s6 + $0x198] sm:$0xff]
        %v1720 = vld [vmem:[%s6 + $0x1a0] sm:$0xff]
        %v1721 = vld [vmem:[%s6 + $0x1a8] sm:$0xff]
        %v1722 = vld [vmem:[%s6 + $0x1b0] sm:$0xff]
        %v1723 = vld [vmem:[%s6 + $0x1b8] sm:$0xff]
        %v1724 = vld [vmem:[%s6 + $0x1c0] sm:$0xff]
        %v1725 = vld [vmem:[%s6 + $0x1c8] sm:$0xff]
        %v1726 = vld [vmem:[%s6 + $0x1d0] sm:$0xff]
        %v1727 = vld [vmem:[%s6 + $0x1d8] sm:$0xff]
        %v1728 = vld [vmem:[%s6 + $0x1e0] sm:$0xff]
        %v1729 = vld [vmem:[%s6 + $0x1e8] sm:$0xff]
        %v1730 = vld [vmem:[%s6 + $0x1f0] sm:$0xff]
        %v1731 = vld [vmem:[%s6 + $0x1f8] sm:$0xff]
        %v1732 = vld [vmem:[%s7] sm:$0x3]
        %v1734 = vlaneseq
        %v1735 = vshrl.u32 %v1734, 7
        %v1736 = vsub.s32 0, %v1735
        %v1737 = vrot.slane %v1732, %v1736
        %v1738 = vlaneseq
        %v1739 = vshrl.u32 %v1738, 7
        %v1740 = vsub.s32 1, %v1739
        %v1741 = vrot.slane %v1732, %v1740
        %v1808 = vunpack.c.l.b16 %v1668
        %v1809 = vunpack.c.h.b16 %v1668
        %v1810 = vunpack.c.l.b16 %v1669
        %v1811 = vunpack.c.h.b16 %v1669
        %v1812 = vunpack.c.l.b16 %v1670
        %v1813 = vunpack.c.h.b16 %v1670
        %v1814 = vunpack.c.l.b16 %v1671
        %v1815 = vunpack.c.h.b16 %v1671
        %v1816 = vunpack.c.l.b16 %v1672
        %v1817 = vunpack.c.h.b16 %v1672
        %v1818 = vunpack.c.l.b16 %v1673
        %v1819 = vunpack.c.h.b16 %v1673
        %v1820 = vunpack.c.l.b16 %v1674
        %v1821 = vunpack.c.h.b16 %v1674
        %v1822 = vunpack.c.l.b16 %v1675
        %v1823 = vunpack.c.h.b16 %v1675
        %v1824 = vunpack.c.l.b16 %v1676
        %v1825 = vunpack.c.h.b16 %v1676
        %v1826 = vunpack.c.l.b16 %v1677
        %v1827 = vunpack.c.h.b16 %v1677
        %v1828 = vunpack.c.l.b16 %v1678
        %v1829 = vunpack.c.h.b16 %v1678
        %v1830 = vunpack.c.l.b16 %v1679
        %v1831 = vunpack.c.h.b16 %v1679
        %v1832 = vunpack.c.l.b16 %v1680
        %v1833 = vunpack.c.h.b16 %v1680
        %v1834 = vunpack.c.l.b16 %v1681
        %v1835 = vunpack.c.h.b16 %v1681
        %v1836 = vunpack.c.l.b16 %v1682
        %v1837 = vunpack.c.h.b16 %v1682
        %v1838 = vunpack.c.l.b16 %v1683
        %v1839 = vunpack.c.h.b16 %v1683
        %v1840 = vunpack.c.l.b16 %v1684
        %v1841 = vunpack.c.h.b16 %v1684
        %v1842 = vunpack.c.l.b16 %v1685
        %v1843 = vunpack.c.h.b16 %v1685
        %v1844 = vunpack.c.l.b16 %v1686
        %v1845 = vunpack.c.h.b16 %v1686
        %v1846 = vunpack.c.l.b16 %v1687
        %v1847 = vunpack.c.h.b16 %v1687
        %v1848 = vunpack.c.l.b16 %v1688
        %v1849 = vunpack.c.h.b16 %v1688
        %v1850 = vunpack.c.l.b16 %v1689
        %v1851 = vunpack.c.h.b16 %v1689
        %v1852 = vunpack.c.l.b16 %v1690
        %v1853 = vunpack.c.h.b16 %v1690
        %v1854 = vunpack.c.l.b16 %v1691
        %v1855 = vunpack.c.h.b16 %v1691
        %v1856 = vunpack.c.l.b16 %v1692
        %v1857 = vunpack.c.h.b16 %v1692
        %v1858 = vunpack.c.l.b16 %v1693
        %v1859 = vunpack.c.h.b16 %v1693
        %v1860 = vunpack.c.l.b16 %v1694
        %v1861 = vunpack.c.h.b16 %v1694
        %v1862 = vunpack.c.l.b16 %v1695
        %v1863 = vunpack.c.h.b16 %v1695
        %v1864 = vunpack.c.l.b16 %v1696
        %v1865 = vunpack.c.h.b16 %v1696
        %v1866 = vunpack.c.l.b16 %v1697
        %v1867 = vunpack.c.h.b16 %v1697
        %v1868 = vunpack.c.l.b16 %v1698
        %v1869 = vunpack.c.h.b16 %v1698
        %v1870 = vunpack.c.l.b16 %v1699
        %v1871 = vunpack.c.h.b16 %v1699
        %v1872 = vunpack.c.l.b16 %v1700
        %v1873 = vunpack.c.h.b16 %v1700
        %v1874 = vunpack.c.l.b16 %v1701
        %v1875 = vunpack.c.h.b16 %v1701
        %v1876 = vunpack.c.l.b16 %v1702
        %v1877 = vunpack.c.h.b16 %v1702
        %v1878 = vunpack.c.l.b16 %v1703
        %v1879 = vunpack.c.h.b16 %v1703
        %v1880 = vunpack.c.l.b16 %v1704
        %v1881 = vunpack.c.h.b16 %v1704
        %v1882 = vunpack.c.l.b16 %v1705
        %v1883 = vunpack.c.h.b16 %v1705
        %v1884 = vunpack.c.l.b16 %v1706
        %v1885 = vunpack.c.h.b16 %v1706
        %v1886 = vunpack.c.l.b16 %v1707
        %v1887 = vunpack.c.h.b16 %v1707
        %v1888 = vunpack.c.l.b16 %v1708
        %v1889 = vunpack.c.h.b16 %v1708
        %v1890 = vunpack.c.l.b16 %v1709
        %v1891 = vunpack.c.h.b16 %v1709
        %v1892 = vunpack.c.l.b16 %v1710
        %v1893 = vunpack.c.h.b16 %v1710
        %v1894 = vunpack.c.l.b16 %v1711
        %v1895 = vunpack.c.h.b16 %v1711
        %v1896 = vunpack.c.l.b16 %v1712
        %v1897 = vunpack.c.h.b16 %v1712
        %v1898 = vunpack.c.l.b16 %v1713
        %v1899 = vunpack.c.h.b16 %v1713
        %v1900 = vunpack.c.l.b16 %v1714
        %v1901 = vunpack.c.h.b16 %v1714
        %v1902 = vunpack.c.l.b16 %v1715
        %v1903 = vunpack.c.h.b16 %v1715
        %v1904 = vunpack.c.l.b16 %v1716
        %v1905 = vunpack.c.h.b16 %v1716
        %v1906 = vunpack.c.l.b16 %v1717
        %v1907 = vunpack.c.h.b16 %v1717
        %v1908 = vunpack.c.l.b16 %v1718
        %v1909 = vunpack.c.h.b16 %v1718
        %v1910 = vunpack.c.l.b16 %v1719
        %v1911 = vunpack.c.h.b16 %v1719
        %v1912 = vunpack.c.l.b16 %v1720
        %v1913 = vunpack.c.h.b16 %v1720
        %v1914 = vunpack.c.l.b16 %v1721
        %v1915 = vunpack.c.h.b16 %v1721
        %v1916 = vunpack.c.l.b16 %v1722
        %v1917 = vunpack.c.h.b16 %v1722
        %v1918 = vunpack.c.l.b16 %v1723
        %v1919 = vunpack.c.h.b16 %v1723
        %v1920 = vunpack.c.l.b16 %v1724
        %v1921 = vunpack.c.h.b16 %v1724
        %v1922 = vunpack.c.l.b16 %v1725
        %v1923 = vunpack.c.h.b16 %v1725
        %v1924 = vunpack.c.l.b16 %v1726
        %v1925 = vunpack.c.h.b16 %v1726
        %v1926 = vunpack.c.l.b16 %v1727
        %v1927 = vunpack.c.h.b16 %v1727
        %v1928 = vunpack.c.l.b16 %v1728
        %v1929 = vunpack.c.h.b16 %v1728
        %v1930 = vunpack.c.l.b16 %v1729
        %v1931 = vunpack.c.h.b16 %v1729
        %v1932 = vunpack.c.l.b16 %v1730
        %v1933 = vunpack.c.h.b16 %v1730
        %v1934 = vunpack.c.l.b16 %v1731
        %v1935 = vunpack.c.h.b16 %v1731
        %v1936 = vpack.c.b16 %v1810, %v1808
        %v1937 = vpack.c.b16 %v1811, %v1809
        %v1938 = vpack.c.b16 %v1814, %v1812
        %v1939 = vpack.c.b16 %v1815, %v1813
        %v1940 = vpack.c.b16 %v1818, %v1816
        %v1941 = vpack.c.b16 %v1819, %v1817
        %v1942 = vpack.c.b16 %v1822, %v1820
        %v1943 = vpack.c.b16 %v1823, %v1821
        %v1944 = vpack.c.b16 %v1826, %v1824
        %v1945 = vpack.c.b16 %v1827, %v1825
        %v1946 = vpack.c.b16 %v1830, %v1828
        %v1947 = vpack.c.b16 %v1831, %v1829
        %v1948 = vpack.c.b16 %v1834, %v1832
        %v1949 = vpack.c.b16 %v1835, %v1833
        %v1950 = vpack.c.b16 %v1838, %v1836
        %v1951 = vpack.c.b16 %v1839, %v1837
        %v1952 = vpack.c.b16 %v1842, %v1840
        %v1953 = vpack.c.b16 %v1843, %v1841
        %v1954 = vpack.c.b16 %v1846, %v1844
        %v1955 = vpack.c.b16 %v1847, %v1845
        %v1956 = vpack.c.b16 %v1850, %v1848
        %v1957 = vpack.c.b16 %v1851, %v1849
        %v1958 = vpack.c.b16 %v1854, %v1852
        %v1959 = vpack.c.b16 %v1855, %v1853
        %v1960 = vpack.c.b16 %v1858, %v1856
        %v1961 = vpack.c.b16 %v1859, %v1857
        %v1962 = vpack.c.b16 %v1862, %v1860
        %v1963 = vpack.c.b16 %v1863, %v1861
        %v1964 = vpack.c.b16 %v1866, %v1864
        %v1965 = vpack.c.b16 %v1867, %v1865
        %v1966 = vpack.c.b16 %v1870, %v1868
        %v1967 = vpack.c.b16 %v1871, %v1869
        %v1968 = vpack.c.b16 %v1874, %v1872
        %v1969 = vpack.c.b16 %v1875, %v1873
        %v1970 = vpack.c.b16 %v1878, %v1876
        %v1971 = vpack.c.b16 %v1879, %v1877
        %v1972 = vpack.c.b16 %v1882, %v1880
        %v1973 = vpack.c.b16 %v1883, %v1881
        %v1974 = vpack.c.b16 %v1886, %v1884
        %v1975 = vpack.c.b16 %v1887, %v1885
        %v1976 = vpack.c.b16 %v1890, %v1888
        %v1977 = vpack.c.b16 %v1891, %v1889
        %v1978 = vpack.c.b16 %v1894, %v1892
        %v1979 = vpack.c.b16 %v1895, %v1893
        %v1980 = vpack.c.b16 %v1898, %v1896
        %v1981 = vpack.c.b16 %v1899, %v1897
        %v1982 = vpack.c.b16 %v1902, %v1900
        %v1983 = vpack.c.b16 %v1903, %v1901
        %v1984 = vpack.c.b16 %v1906, %v1904
        %v1985 = vpack.c.b16 %v1907, %v1905
        %v1986 = vpack.c.b16 %v1910, %v1908
        %v1987 = vpack.c.b16 %v1911, %v1909
        %v1988 = vpack.c.b16 %v1914, %v1912
        %v1989 = vpack.c.b16 %v1915, %v1913
        %v1990 = vpack.c.b16 %v1918, %v1916
        %v1991 = vpack.c.b16 %v1919, %v1917
        %v1992 = vpack.c.b16 %v1922, %v1920
        %v1993 = vpack.c.b16 %v1923, %v1921
        %v1994 = vpack.c.b16 %v1926, %v1924
        %v1995 = vpack.c.b16 %v1927, %v1925
        %v1996 = vpack.c.b16 %v1930, %v1928
        %v1997 = vpack.c.b16 %v1931, %v1929
        %v1998 = vpack.c.b16 %v1934, %v1932
        %v1999 = vpack.c.b16 %v1935, %v1933
        %2064 = vmatprep.subr.bf16.mxu0 %v1937
        %2065 = vmatpush1.bf16.msra.mxu0 %v1936
        %2066 = vmatprep.subr.bf16.mxu0 %v1939
        %2067 = vmatpush1.bf16.msra.mxu0 %v1938
        %2068 = vmatprep.subr.bf16.mxu0 %v1941
        %2069 = vmatpush1.bf16.msra.mxu0 %v1940
        %2070 = vmatprep.subr.bf16.mxu0 %v1943
        %2071 = vmatpush1.bf16.msra.mxu0 %v1942
        %2072 = vmatprep.subr.bf16.mxu0 %v1945
        %2073 = vmatpush1.bf16.msra.mxu0 %v1944
        %2074 = vmatprep.subr.bf16.mxu0 %v1947
        %2075 = vmatpush1.bf16.msra.mxu0 %v1946
        %2076 = vmatprep.subr.bf16.mxu0 %v1949
        %2077 = vmatpush1.bf16.msra.mxu0 %v1948
        %2078 = vmatprep.subr.bf16.mxu0 %v1951
        %2079 = vmatpush1.bf16.msra.mxu0 %v1950
        %2080 = vmatprep.subr.bf16.mxu0 %v1953
        %2081 = vmatpush1.bf16.msra.mxu0 %v1952
        %2082 = vmatprep.subr.bf16.mxu0 %v1955
        %2083 = vmatpush1.bf16.msra.mxu0 %v1954
        %2084 = vmatprep.subr.bf16.mxu0 %v1957
        %2085 = vmatpush1.bf16.msra.mxu0 %v1956
        %2086 = vmatprep.subr.bf16.mxu0 %v1959
        %2087 = vmatpush1.bf16.msra.mxu0 %v1958
        %2088 = vmatprep.subr.bf16.mxu0 %v1961
        %2089 = vmatpush1.bf16.msra.mxu0 %v1960
        %2090 = vmatprep.subr.bf16.mxu0 %v1963
        %2091 = vmatpush1.bf16.msra.mxu0 %v1962
        %2092 = vmatprep.subr.bf16.mxu0 %v1965
        %2093 = vmatpush1.bf16.msra.mxu0 %v1964
        %2094 = vmatprep.subr.bf16.mxu0 %v1967
        %2095 = vmatpush1.bf16.msra.mxu0 %v1966
        %2096 = vmatprep.mubr.bf16.mxu0 %v1637
        %2097 = vmatmul.mubr.bf16.gmra.mrb[0].mxu0 %v1636
        %v2098 = vpop.f32.mrb[0].mxu0
        %v2099 = vadd.f32 %v1737, %v2098
        %v2100 = vpop.f32.mrb[0].mxu0
        %v2101 = vadd.f32 %v1741, %v2100
        %v2102 = vpop.f32.mrb[0].mxu0
        %v2103 = vadd.f32 %v1737, %v2102
        %v2104 = vpop.f32.mrb[0].mxu0
        %v2105 = vadd.f32 %v1741, %v2104
        %2106 = vmatprep.mubr.bf16.mxu0 %v1641
        %2107 = vmatmul.mubr.bf16.gmra.mrb[0].mxu0 %v1640
        %v2108 = vpop.f32.mrb[0].mxu0
        %v2109 = vadd.f32 %v1737, %v2108
        %v2110 = vpop.f32.mrb[0].mxu0
        %v2111 = vadd.f32 %v1741, %v2110
        %v2112 = vpop.f32.mrb[0].mxu0
        %v2113 = vadd.f32 %v1737, %v2112
        %v2114 = vpop.f32.mrb[0].mxu0
        %v2115 = vadd.f32 %v1741, %v2114
        %2116 = vmatprep.mubr.bf16.mxu0 %v1645
        %2117 = vmatmul.mubr.bf16.gmra.mrb[0].mxu0 %v1644
        %v2118 = vpop.f32.mrb[0].mxu0
        %v2119 = vadd.f32 %v1737, %v2118
        %v2120 = vpop.f32.mrb[0].mxu0
        %v2121 = vadd.f32 %v1741, %v2120
        %v2122 = vpop.f32.mrb[0].mxu0
        %v2123 = vadd.f32 %v1737, %v2122
        %v2124 = vpop.f32.mrb[0].mxu0
        %v2125 = vadd.f32 %v1741, %v2124
        %2126 = vmatprep.mubr.bf16.mxu0 %v1649
        %2127 = vmatmul.mubr.bf16.gmra.mrb[0].mxu0 %v1648
        %v2128 = vpop.f32.mrb[0].mxu0
        %v2129 = vadd.f32 %v1737, %v2128
        %v2130 = vpop.f32.mrb[0].mxu0
        %v2131 = vadd.f32 %v1741, %v2130
        %v2132 = vpop.f32.mrb[0].mxu0
        %v2133 = vadd.f32 %v1737, %v2132
        %v2134 = vpop.f32.mrb[0].mxu0
        %v2135 = vadd.f32 %v1741, %v2134
        %2136 = vmatprep.mubr.bf16.mxu0 %v1653
        %2137 = vmatmul.mubr.bf16.gmra.mrb[0].mxu0 %v1652
        %v2138 = vpop.f32.mrb[0].mxu0
        %v2139 = vadd.f32 %v1737, %v2138
        %v2140 = vpop.f32.mrb[0].mxu0
        %v2141 = vadd.f32 %v1741, %v2140
        %v2142 = vpop.f32.mrb[0].mxu0
        %v2143 = vadd.f32 %v1737, %v2142
        %v2144 = vpop.f32.mrb[0].mxu0
        %v2145 = vadd.f32 %v1741, %v2144
        %2146 = vmatprep.mubr.bf16.mxu0 %v1657
        %2147 = vmatmul.mubr.bf16.gmra.mrb[0].mxu0 %v1656
        %v2148 = vpop.f32.mrb[0].mxu0
        %v2149 = vadd.f32 %v1737, %v2148
        %v2150 = vpop.f32.mrb[0].mxu0
        %v2151 = vadd.f32 %v1741, %v2150
        %v2152 = vpop.f32.mrb[0].mxu0
        %v2153 = vadd.f32 %v1737, %v2152
        %v2154 = vpop.f32.mrb[0].mxu0
        %v2155 = vadd.f32 %v1741, %v2154
        %2156 = vmatprep.mubr.bf16.mxu0 %v1661
        %2157 = vmatmul.mubr.bf16.gmra.mrb[0].mxu0 %v1660
        %v2158 = vpop.f32.mrb[0].mxu0
        %v2159 = vadd.f32 %v1737, %v2158
        %v2160 = vpop.f32.mrb[0].mxu0
        %v2161 = vadd.f32 %v1741, %v2160
        %v2162 = vpop.f32.mrb[0].mxu0
        %v2163 = vadd.f32 %v1737, %v2162
        %v2164 = vpop.f32.mrb[0].mxu0
        %v2165 = vadd.f32 %v1741, %v2164
        %2166 = vmatprep.mubr.bf16.mxu0 %v1665
        %2167 = vmatmul.mubr.bf16.gmra.mrb[0].mxu0 %v1664
        %v2168 = vpop.f32.mrb[0].mxu0
        %v2169 = vadd.f32 %v1737, %v2168
        %v2170 = vpop.f32.mrb[0].mxu0
        %v2171 = vadd.f32 %v1741, %v2170
        %v2172 = vpop.f32.mrb[0].mxu0
        %v2173 = vadd.f32 %v1737, %v2172
        %v2174 = vpop.f32.mrb[0].mxu0
        %v2175 = vadd.f32 %v1741, %v2174
        %2176 = vdwg.mxu0
        %2177 = vmatprep.subr.bf16.mxu0 %v1969
        %2178 = vmatpush1.bf16.msra.mxu0 %v1968
        %2179 = vmatprep.subr.bf16.mxu0 %v1971
        %2180 = vmatpush1.bf16.msra.mxu0 %v1970
        %2181 = vmatprep.subr.bf16.mxu0 %v1973
        %2182 = vmatpush1.bf16.msra.mxu0 %v1972
        %2183 = vmatprep.subr.bf16.mxu0 %v1975
        %2184 = vmatpush1.bf16.msra.mxu0 %v1974
        %2185 = vmatprep.subr.bf16.mxu0 %v1977
        %2186 = vmatpush1.bf16.msra.mxu0 %v1976
        %2187 = vmatprep.subr.bf16.mxu0 %v1979
        %2188 = vmatpush1.bf16.msra.mxu0 %v1978
        %2189 = vmatprep.subr.bf16.mxu0 %v1981
        %2190 = vmatpush1.bf16.msra.mxu0 %v1980
        %2191 = vmatprep.subr.bf16.mxu0 %v1983
        %2192 = vmatpush1.bf16.msra.mxu0 %v1982
        %2193 = vmatprep.subr.bf16.mxu0 %v1985
        %2194 = vmatpush1.bf16.msra.mxu0 %v1984
        %2195 = vmatprep.subr.bf16.mxu0 %v1987
        %2196 = vmatpush1.bf16.msra.mxu0 %v1986
        %2197 = vmatprep.subr.bf16.mxu0 %v1989
        %2198 = vmatpush1.bf16.msra.mxu0 %v1988
        %2199 = vmatprep.subr.bf16.mxu0 %v1991
        %2200 = vmatpush1.bf16.msra.mxu0 %v1990
        %2201 = vmatprep.subr.bf16.mxu0 %v1993
        %2202 = vmatpush1.bf16.msra.mxu0 %v1992
        %2203 = vmatprep.subr.bf16.mxu0 %v1995
        %2204 = vmatpush1.bf16.msra.mxu0 %v1994
        %2205 = vmatprep.subr.bf16.mxu0 %v1997
        %2206 = vmatpush1.bf16.msra.mxu0 %v1996
        %2207 = vmatprep.subr.bf16.mxu0 %v1999
        %2208 = vmatpush1.bf16.msra.mxu0 %v1998
        %2209 = vmatprep.mubr.bf16.mxu0 %v1639
        %2210 = vmatmul.mubr.bf16.gmra.mrb[0].mxu0 %v1638
        %v2211 = vpop.f32.mrb[0].mxu0
        %v2212 = vadd.f32 %v2099, %v2211
        %v2213 = vpop.f32.mrb[0].mxu0
        %v2214 = vadd.f32 %v2101, %v2213
        %v2215 = vpop.f32.mrb[0].mxu0
        %v2216 = vadd.f32 %v2103, %v2215
        %v2217 = vpop.f32.mrb[0].mxu0
        %v2218 = vadd.f32 %v2105, %v2217
        %2219 = vmatprep.mubr.bf16.mxu0 %v1643
        %2220 = vmatmul.mubr.bf16.gmra.mrb[0].mxu0 %v1642
        %v2221 = vpop.f32.mrb[0].mxu0
        %v2222 = vadd.f32 %v2109, %v2221
        %v2223 = vpop.f32.mrb[0].mxu0
        %v2224 = vadd.f32 %v2111, %v2223
        %v2225 = vpop.f32.mrb[0].mxu0
        %v2226 = vadd.f32 %v2113, %v2225
        %v2227 = vpop.f32.mrb[0].mxu0
        %v2228 = vadd.f32 %v2115, %v2227
        %2229 = vmatprep.mubr.bf16.mxu0 %v1647
        %2230 = vmatmul.mubr.bf16.gmra.mrb[0].mxu0 %v1646
        %v2231 = vpop.f32.mrb[0].mxu0
        %v2232 = vadd.f32 %v2119, %v2231
        %v2233 = vpop.f32.mrb[0].mxu0
        %v2234 = vadd.f32 %v2121, %v2233
        %v2235 = vpop.f32.mrb[0].mxu0
        %v2236 = vadd.f32 %v2123, %v2235
        %v2237 = vpop.f32.mrb[0].mxu0
        %v2238 = vadd.f32 %v2125, %v2237
        %2239 = vmatprep.mubr.bf16.mxu0 %v1651
        %2240 = vmatmul.mubr.bf16.gmra.mrb[0].mxu0 %v1650
        %v2241 = vpop.f32.mrb[0].mxu0
        %v2242 = vadd.f32 %v2129, %v2241
        %v2243 = vpop.f32.mrb[0].mxu0
        %v2244 = vadd.f32 %v2131, %v2243
        %v2245 = vpop.f32.mrb[0].mxu0
        %v2246 = vadd.f32 %v2133, %v2245
        %v2247 = vpop.f32.mrb[0].mxu0
        %v2248 = vadd.f32 %v2135, %v2247
        %2249 = vmatprep.mubr.bf16.mxu0 %v1655
        %2250 = vmatmul.mubr.bf16.gmra.mrb[0].mxu0 %v1654
        %v2251 = vpop.f32.mrb[0].mxu0
        %v2252 = vadd.f32 %v2139, %v2251
        %v2253 = vpop.f32.mrb[0].mxu0
        %v2254 = vadd.f32 %v2141, %v2253
        %v2255 = vpop.f32.mrb[0].mxu0
        %v2256 = vadd.f32 %v2143, %v2255
        %v2257 = vpop.f32.mrb[0].mxu0
        %v2258 = vadd.f32 %v2145, %v2257
        %2259 = vmatprep.mubr.bf16.mxu0 %v1659
        %2260 = vmatmul.mubr.bf16.gmra.mrb[0].mxu0 %v1658
        %v2261 = vpop.f32.mrb[0].mxu0
        %v2262 = vadd.f32 %v2149, %v2261
        %v2263 = vpop.f32.mrb[0].mxu0
        %v2264 = vadd.f32 %v2151, %v2263
        %v2265 = vpop.f32.mrb[0].mxu0
        %v2266 = vadd.f32 %v2153, %v2265
        %v2267 = vpop.f32.mrb[0].mxu0
        %v2268 = vadd.f32 %v2155, %v2267
        %2269 = vmatprep.mubr.bf16.mxu0 %v1663
        %2270 = vmatmul.mubr.bf16.gmra.mrb[0].mxu0 %v1662
        %v2271 = vpop.f32.mrb[0].mxu0
        %v2272 = vadd.f32 %v2159, %v2271
        %v2273 = vpop.f32.mrb[0].mxu0
        %v2274 = vadd.f32 %v2161, %v2273
        %v2275 = vpop.f32.mrb[0].mxu0
        %v2276 = vadd.f32 %v2163, %v2275
        %v2277 = vpop.f32.mrb[0].mxu0
        %v2278 = vadd.f32 %v2165, %v2277
        %2279 = vmatprep.mubr.bf16.mxu0 %v1667
        %2280 = vmatmul.mubr.bf16.gmra.mrb[0].mxu0 %v1666
        %v2281 = vpop.f32.mrb[0].mxu0
        %v2282 = vadd.f32 %v2169, %v2281
        %v2283 = vpop.f32.mrb[0].mxu0
        %v2284 = vadd.f32 %v2171, %v2283
        %v2285 = vpop.f32.mrb[0].mxu0
        %v2286 = vadd.f32 %v2173, %v2285
        %v2287 = vpop.f32.mrb[0].mxu0
        %v2288 = vadd.f32 %v2175, %v2287
        %2289 = vdwg.mxu0
        %v2290 = vxor.u32 %v2212, 2147483648
        %v2291 = vxor.u32 %v2214, 2147483648
        %v2292 = vxor.u32 %v2216, 2147483648
        %v2293 = vxor.u32 %v2218, 2147483648
        %v2294 = vxor.u32 %v2222, 2147483648
        %v2295 = vxor.u32 %v2224, 2147483648
        %v2296 = vxor.u32 %v2226, 2147483648
        %v2297 = vxor.u32 %v2228, 2147483648
        %v2298 = vxor.u32 %v2232, 2147483648
        %v2299 = vxor.u32 %v2234, 2147483648
        %v2300 = vxor.u32 %v2236, 2147483648
        %v2301 = vxor.u32 %v2238, 2147483648
        %v2302 = vxor.u32 %v2242, 2147483648
        %v2303 = vxor.u32 %v2244, 2147483648
        %v2304 = vxor.u32 %v2246, 2147483648
        %v2305 = vxor.u32 %v2248, 2147483648
        %v2306 = vxor.u32 %v2252, 2147483648
        %v2307 = vxor.u32 %v2254, 2147483648
        %v2308 = vxor.u32 %v2256, 2147483648
        %v2309 = vxor.u32 %v2258, 2147483648
        %v2310 = vxor.u32 %v2262, 2147483648
        %v2311 = vxor.u32 %v2264, 2147483648
        %v2312 = vxor.u32 %v2266, 2147483648
        %v2313 = vxor.u32 %v2268, 2147483648
        %v2314 = vxor.u32 %v2272, 2147483648
        %v2315 = vxor.u32 %v2274, 2147483648
        %v2316 = vxor.u32 %v2276, 2147483648
        %v2317 = vxor.u32 %v2278, 2147483648
        %v2318 = vxor.u32 %v2282, 2147483648
        %v2319 = vxor.u32 %v2284, 2147483648
        %v2320 = vxor.u32 %v2286, 2147483648
        %v2321 = vxor.u32 %v2288, 2147483648
        %v2322 = vmul.f32 %v2290, 1.442695
        %v2323 = vpow.pop %v2322
        %v2324 = vmul.f32 %v2291, 1.442695
        %v2325 = vpow.pop %v2324
        %v2326 = vmul.f32 %v2292, 1.442695
        %v2327 = vpow.pop %v2326
        %v2328 = vmul.f32 %v2293, 1.442695
        %v2329 = vpow.pop %v2328
        %v2330 = vmul.f32 %v2294, 1.442695
        %v2331 = vpow.pop %v2330
        %v2332 = vmul.f32 %v2295, 1.442695
        %v2333 = vpow.pop %v2332
        %v2334 = vmul.f32 %v2296, 1.442695
        %v2335 = vpow.pop %v2334
        %v2336 = vmul.f32 %v2297, 1.442695
        %v2337 = vpow.pop %v2336
        %v2338 = vmul.f32 %v2298, 1.442695
        %v2339 = vpow.pop %v2338
        %v2340 = vmul.f32 %v2299, 1.442695
        %v2341 = vpow.pop %v2340
        %v2342 = vmul.f32 %v2300, 1.442695
        %v2343 = vpow.pop %v2342
        %v2344 = vmul.f32 %v2301, 1.442695
        %v2345 = vpow.pop %v2344
        %v2346 = vmul.f32 %v2302, 1.442695
        %v2347 = vpow.pop %v2346
        %v2348 = vmul.f32 %v2303, 1.442695
        %v2349 = vpow.pop %v2348
        %v2350 = vmul.f32 %v2304, 1.442695
        %v2351 = vpow.pop %v2350
        %v2352 = vmul.f32 %v2305, 1.442695
        %v2353 = vpow.pop %v2352
        %v2354 = vmul.f32 %v2306, 1.442695
        %v2355 = vpow.pop %v2354
        %v2356 = vmul.f32 %v2307, 1.442695
        %v2357 = vpow.pop %v2356
        %v2358 = vmul.f32 %v2308, 1.442695
        %v2359 = vpow.pop %v2358
        %v2360 = vmul.f32 %v2309, 1.442695
        %v2361 = vpow.pop %v2360
        %v2362 = vmul.f32 %v2310, 1.442695
        %v2363 = vpow.pop %v2362
        %v2364 = vmul.f32 %v2311, 1.442695
        %v2365 = vpow.pop %v2364
        %v2366 = vmul.f32 %v2312, 1.442695
        %v2367 = vpow.pop %v2366
        %v2368 = vmul.f32 %v2313, 1.442695
        %v2369 = vpow.pop %v2368
        %v2370 = vmul.f32 %v2314, 1.442695
        %v2371 = vpow.pop %v2370
        %v2372 = vmul.f32 %v2315, 1.442695
        %v2373 = vpow.pop %v2372
        %v2374 = vmul.f32 %v2316, 1.442695
        %v2375 = vpow.pop %v2374
        %v2376 = vmul.f32 %v2317, 1.442695
        %v2377 = vpow.pop %v2376
        %v2378 = vmul.f32 %v2318, 1.442695
        %v2379 = vpow.pop %v2378
        %v2380 = vmul.f32 %v2319, 1.442695
        %v2381 = vpow.pop %v2380
        %v2382 = vmul.f32 %v2320, 1.442695
        %v2383 = vpow.pop %v2382
        %v2384 = vmul.f32 %v2321, 1.442695
        %v2385 = vpow.pop %v2384
        %v2386 = vadd.f32 %v2323, 1.0
        %v2387 = vadd.f32 %v2325, 1.0
        %v2388 = vadd.f32 %v2327, 1.0
        %v2389 = vadd.f32 %v2329, 1.0
        %v2390 = vadd.f32 %v2331, 1.0
        %v2391 = vadd.f32 %v2333, 1.0
        %v2392 = vadd.f32 %v2335, 1.0
        %v2393 = vadd.f32 %v2337, 1.0
        %v2394 = vadd.f32 %v2339, 1.0
        %v2395 = vadd.f32 %v2341, 1.0
        %v2396 = vadd.f32 %v2343, 1.0
        %v2397 = vadd.f32 %v2345, 1.0
        %v2398 = vadd.f32 %v2347, 1.0
        %v2399 = vadd.f32 %v2349, 1.0
        %v2400 = vadd.f32 %v2351, 1.0
        %v2401 = vadd.f32 %v2353, 1.0
        %v2402 = vadd.f32 %v2355, 1.0
        %v2403 = vadd.f32 %v2357, 1.0
        %v2404 = vadd.f32 %v2359, 1.0
        %v2405 = vadd.f32 %v2361, 1.0
        %v2406 = vadd.f32 %v2363, 1.0
        %v2407 = vadd.f32 %v2365, 1.0
        %v2408 = vadd.f32 %v2367, 1.0
        %v2409 = vadd.f32 %v2369, 1.0
        %v2410 = vadd.f32 %v2371, 1.0
        %v2411 = vadd.f32 %v2373, 1.0
        %v2412 = vadd.f32 %v2375, 1.0
        %v2413 = vadd.f32 %v2377, 1.0
        %v2414 = vadd.f32 %v2379, 1.0
        %v2415 = vadd.f32 %v2381, 1.0
        %v2416 = vadd.f32 %v2383, 1.0
        %v2417 = vadd.f32 %v2385, 1.0
        %v2418 = vrcp.pop %v2386
        %v2419 = vmul.f32 1.0, %v2418
        %v2420 = vrcp.pop %v2387
        %v2421 = vmul.f32 1.0, %v2420
        %v2422 = vrcp.pop %v2388
        %v2423 = vmul.f32 1.0, %v2422
        %v2424 = vrcp.pop %v2389
        %v2425 = vmul.f32 1.0, %v2424
        %v2426 = vrcp.pop %v2390
        %v2427 = vmul.f32 1.0, %v2426
        %v2428 = vrcp.pop %v2391
        %v2429 = vmul.f32 1.0, %v2428
        %v2430 = vrcp.pop %v2392
        %v2431 = vmul.f32 1.0, %v2430
        %v2432 = vrcp.pop %v2393
        %v2433 = vmul.f32 1.0, %v2432
        %v2434 = vrcp.pop %v2394
        %v2435 = vmul.f32 1.0, %v2434
        %v2436 = vrcp.pop %v2395
        %v2437 = vmul.f32 1.0, %v2436
        %v2438 = vrcp.pop %v2396
        %v2439 = vmul.f32 1.0, %v2438
        %v2440 = vrcp.pop %v2397
        %v2441 = vmul.f32 1.0, %v2440
        %v2442 = vrcp.pop %v2398
        %v2443 = vmul.f32 1.0, %v2442
        %v2444 = vrcp.pop %v2399
        %v2445 = vmul.f32 1.0, %v2444
        %v2446 = vrcp.pop %v2400
        %v2447 = vmul.f32 1.0, %v2446
        %v2448 = vrcp.pop %v2401
        %v2449 = vmul.f32 1.0, %v2448
        %v2450 = vrcp.pop %v2402
        %v2451 = vmul.f32 1.0, %v2450
        %v2452 = vrcp.pop %v2403
        %v2453 = vmul.f32 1.0, %v2452
        %v2454 = vrcp.pop %v2404
        %v2455 = vmul.f32 1.0, %v2454
        %v2456 = vrcp.pop %v2405
        %v2457 = vmul.f32 1.0, %v2456
        %v2458 = vrcp.pop %v2406
        %v2459 = vmul.f32 1.0, %v2458
        %v2460 = vrcp.pop %v2407
        %v2461 = vmul.f32 1.0, %v2460
        %v2462 = vrcp.pop %v2408
        %v2463 = vmul.f32 1.0, %v2462
        %v2464 = vrcp.pop %v2409
        %v2465 = vmul.f32 1.0, %v2464
        %v2466 = vrcp.pop %v2410
        %v2467 = vmul.f32 1.0, %v2466
        %v2468 = vrcp.pop %v2411
        %v2469 = vmul.f32 1.0, %v2468
        %v2470 = vrcp.pop %v2412
        %v2471 = vmul.f32 1.0, %v2470
        %v2472 = vrcp.pop %v2413
        %v2473 = vmul.f32 1.0, %v2472
        %v2474 = vrcp.pop %v2414
        %v2475 = vmul.f32 1.0, %v2474
        %v2476 = vrcp.pop %v2415
        %v2477 = vmul.f32 1.0, %v2476
        %v2478 = vrcp.pop %v2416
        %v2479 = vmul.f32 1.0, %v2478
        %v2480 = vrcp.pop %v2417
        %v2481 = vmul.f32 1.0, %v2480
        %v2482 = vld [vmem:[%s8] sm:$0x3]
        %v2483 = vpack.c.bf16 %v2423, %v2419
        %v2484 = vpack.c.bf16 %v2425, %v2421
        %v2485 = vpack.c.bf16 %v2431, %v2427
        %v2486 = vpack.c.bf16 %v2433, %v2429
        %v2487 = vpack.c.bf16 %v2439, %v2435
        %v2488 = vpack.c.bf16 %v2441, %v2437
        %v2489 = vpack.c.bf16 %v2447, %v2443
        %v2490 = vpack.c.bf16 %v2449, %v2445
        %v2491 = vpack.c.bf16 %v2455, %v2451
        %v2492 = vpack.c.bf16 %v2457, %v2453
        %v2493 = vpack.c.bf16 %v2463, %v2459
        %v2494 = vpack.c.bf16 %v2465, %v2461
        %v2495 = vpack.c.bf16 %v2471, %v2467
        %v2496 = vpack.c.bf16 %v2473, %v2469
        %v2497 = vpack.c.bf16 %v2479, %v2475
        %v2498 = vpack.c.bf16 %v2481, %v2477
        %s2499 = sld [smem:[#allocation2]]
        %v2500 = vstv %s2499
        %v2503 = vunpack.c.l.s4 1966171168
        %v2504 = vunpack.c.0.s8 %v2503
        %v2505 = vlaneseq
        %v2506 = vshrl.u32 %v2505, 7
        %v2507 = vsub.s32 %v2504, %v2506
        %v2508 = vrot.slane %v2482, %v2507
        %v2509 = vcombine.high %v2508, %v2508
        %v2511 = vunpack.c.l.s4 1966171168
        %v2512 = vunpack.c.0.s8 %v2511
        %v2513 = vlaneseq
        %v2514 = vshrl.u32 %v2513, 7
        %v2515 = vsub.s32 %v2512, %v2514
        %v2516 = vrot.slane %v2508, %v2515
        %v2518 = vunpack.c.l.s4 1966171168
        %v2519 = vunpack.c.0.s8 %v2518
        %v2520 = vlaneseq
        %v2521 = vshrl.u32 %v2520, 7
        %v2522 = vsub.s32 %v2519, %v2521
        %v2523 = vrot.slane %v2509, %v2522
        %2526 = vmatprep.subr.bf16.mxu0 %v2484
        %2527 = vmatpush1.bf16.xpose.msra.mxu0 %v2483
        %2528 = vmatprep.subr.bf16.mxu0 %v2486
        %2529 = vmatpush1.bf16.xpose.msra.mxu0 %v2485
        %2530 = vmatprep.subr.bf16.mxu0 %v2488
        %2531 = vmatpush1.bf16.xpose.msra.mxu0 %v2487
        %2532 = vmatprep.subr.bf16.mxu0 %v2490
        %2533 = vmatpush1.bf16.xpose.msra.mxu0 %v2489
        %2534 = vmatprep.subr.bf16.mxu0 %v2492
        %2535 = vmatpush1.bf16.xpose.msra.mxu0 %v2491
        %2536 = vmatprep.subr.bf16.mxu0 %v2494
        %2537 = vmatpush1.bf16.xpose.msra.mxu0 %v2493
        %2538 = vmatprep.subr.bf16.mxu0 %v2496
        %2539 = vmatpush1.bf16.xpose.msra.mxu0 %v2495
        %2540 = vmatprep.subr.bf16.mxu0 %v2498
        %2541 = vmatpush1.bf16.xpose.msra.mxu0 %v2497
        %2542 = vmatprep.subr.bf16.mxu0 0
        %2543 = vmatpush1.bf16.xpose.msra.mxu0 0
        %2544 = vmatprep.subr.bf16.mxu0 0
        %2545 = vmatpush1.bf16.xpose.msra.mxu0 0
        %2546 = vmatprep.subr.bf16.mxu0 0
        %2547 = vmatpush1.bf16.xpose.msra.mxu0 0
        %2548 = vmatprep.subr.bf16.mxu0 0
        %2549 = vmatpush1.bf16.xpose.msra.mxu0 0
        %2550 = vmatprep.subr.bf16.mxu0 0
        %2551 = vmatpush1.bf16.xpose.msra.mxu0 0
        %2552 = vmatprep.subr.bf16.mxu0 0
        %2553 = vmatpush1.bf16.xpose.msra.mxu0 0
        %2554 = vmatprep.subr.bf16.mxu0 0
        %2555 = vmatpush1.bf16.xpose.msra.mxu0 0
        %2556 = vmatprep.subr.bf16.mxu0 0
        %2557 = vmatpush1.bf16.xpose.msra.mxu0 0
        %2558 = vmatprep.mubr.bf16.mxu0 %v2523
        %2559 = vmatmul.mubr.bf16.gmra.mrb[0].mxu0 %v2516
        %v2560 = vpop.f32.mrb[0].mxu0
        %v2561 = vadd.f32 %v2500, %v2560
        %v2562 = vpop.f32.mrb[0].mxu0
        %v2563 = vpop.f32.mrb[0].mxu0
        %v2564 = vpop.f32.mrb[0].mxu0
        %2565 = vdwg.mxu0
        %v2566 = vxor.u32 %v2561, 2147483648
        %v2567 = vmul.f32 %v2566, 1.442695
        %v2568 = vpow.pop %v2567
        %v2569 = vadd.f32 %v2568, 1.0
        %v2570 = vrcp.pop %v2569
        %v2571 = vmul.f32 1.0, %v2570
        %2572 = vst [vmem:[%s401] sm:$0x1] %v2571
        %s2573 = sand.u32 %s263, 1
        %s2574 = scalar_lea.sflag [#allocation4], %s2573
        %s2575 = sand.u32 %s263, 1
        %s2576 = scalar_lea.vmem [#allocation3], %s2575
        // Predicated region
        $region61: #{tpu_custom_call.1} parent=59 // pred_check
          %p2577 = pneg %p273
        $region62: #{tpu_custom_call.1} parent=59 // pred_check_branch
          %2579 = sbr.rel (%p2577) target = $region64
        $region63: #{tpu_custom_call.1} parent=59 // pred_region
          %s2581 = ssub.s32 16, 16
          %2582 = vsyncadd %s2574, %s2581
          %s2583 = smul.addr %s25, 16
          %s2584 = scalar_lea.hbm %s10, %s2583
          %s2586 = sshll.u32 %s2576, 4
          %s2587 = int_to_ptr.vmem [resolvable:$true] %s2586
          %2589 = dma.vmem_to_hbm [thread:$0]  %s2587, 16, %s2584, %s2574
        $region64: #{tpu_custom_call.1} parent=59 // pred_fallthru
          _
      $region60: #{tpu_custom_call.1} parent=5 // pred_fallthru
        _
      %p2590 = scmp.le.s32.totalorder 2, %s20
      // Predicated region
      $region65: #{tpu_custom_call.1} parent=5 // pred_check
        %p2591 = pneg %p2590
      $region66: #{tpu_custom_call.1} parent=5 // pred_check_branch
        %2593 = sbr.rel (%p2591) target = $region68
      $region67: #{tpu_custom_call.1} parent=5 // pred_region
        %s2594 = ssub.s32 %s20, 2
        // Predicated region
        $region69: #{tpu_custom_call.1} parent=67 // pred_check
          %p2595 = pneg %p279
        $region70: #{tpu_custom_call.1} parent=67 // pred_check_branch
          %2597 = sbr.rel (%p2595) target = $region72
        $region71: #{tpu_custom_call.1} parent=67 // pred_region
          %s2598 = sand.u32 %s264, 1
          %s2599 = scalar_lea.sflag [#allocation4], %s2598
          %s2600 = sand.u32 %s264, 1
          %s2601 = scalar_lea.vmem [#allocation3], %s2600
          %2602 = dma.done %s2599, 16
        $region72: #{tpu_custom_call.1} parent=67 // pred_fallthru
          _
      $region68: #{tpu_custom_call.1} parent=5 // pred_fallthru
        _
    $region6: #{tpu_custom_call.1} parent=1 // loop_footer
      %s24 = sadd.s32 1, %s20
    $region7: #{tpu_custom_call.1} parent=1 // loop_footer_branch
      %19 = sbr.rel target = $region3
    $region8: #{tpu_custom_call.1} parent=1 // loop_exit
      _
    %2603 = vsyncpa [#allocation4], 1
    %s2604 = scalar_lea.sflag [#allocation4], 1
    %2605 = vsyncpa %s2604, 1

</llo_original>
